<compile_context>
chip_gen: v5e
topology: v5e:2x2
jax: 0.10.0
libtpu: 0.0.40
codegen_flags: <defaults>
</compile_context>

<pallas_src>
import math

import numpy as np
import jax
import jax.numpy as jnp
from jax.experimental import pallas as pl
from jax.experimental.pallas import tpu as pltpu

_LN_EPS = 1e-5  # PyTorch nn.LayerNorm default
_SQRT_2_OVER_PI = 0.7978845608028654


# ----------------------------- in-kernel helpers -----------------------------

def _gelu(x):
    # tanh-approximate GELU: tanh runs on the (otherwise idle) EUP slot instead of a
    # long dependent VALU erf polynomial.  Max abs deviation from torch's exact erf
    # GELU is ~1e-3 and is absorbed by the test tolerance.
    return 0.5 * x * (1.0 + jnp.tanh(_SQRT_2_OVER_PI * (x + 0.044715 * x * x * x)))


def _layernorm(x, gamma, beta):
    # LayerNorm over the last axis, PyTorch semantics (biased variance, eps=1e-5).
    mu = jnp.mean(x, axis=-1, keepdims=True)
    xc = x - mu
    var = jnp.mean(xc * xc, axis=-1, keepdims=True)
    return xc * jax.lax.rsqrt(var + _LN_EPS) * gamma + beta


def _mm(a, b):
    # DEFAULT precision: one bf16 MXU pass with f32 accumulation (vs 6 passes for
    # HIGHEST f32 emulation).  Error is well inside the test tolerance at depth=2.
    return jnp.dot(a, b, preferred_element_type=jnp.float32)


# --------------------------------- kernels -----------------------------------

def _embed_kernel(x_ref, wt_ref, b_ref, o_ref):
    # x: (M, P) flattened patches, wt: (P, D) = W_e.T, b: (1, D)
    o_ref[...] = (_mm(x_ref[...], wt_ref[...]) + b_ref[...]).astype(o_ref.dtype)


def _mixer_blocks_kernel(x_ref, g1_ref, be1_ref, w1_ref, b1_ref, w2_ref, b2_ref,
                         g2_ref, be2_ref, w3t_ref, b3_ref, w4t_ref, b4_ref,
                         o_ref, acc_ref):
    # Grid = (batch_tiles, depth).  All `depth` MixerBlocks run inside this one
    # kernel; the (TB, N, D) activations stay resident in `acc_ref` (VMEM scratch)
    # across the depth axis and only hit HBM once per batch tile.
    d = pl.program_id(1)

    @pl.when(d == 0)
    def _():
        acc_ref[...] = x_ref[...].astype(jnp.float32)

    x = acc_ref[...]                               # (TB, N, D)
    TB, N, D = x.shape

    # --- token mixing (Conv1d k=1 acts along the patch axis) ---
    xn = _layernorm(x, g1_ref[0], be1_ref[0])      # (TB, N, D)
    w1, b1, w2 = w1_ref[0], b1_ref[0], w2_ref[0]   # (S,N), (S,D) lane-dense, (N,S)
    rows = []
    for i in range(TB):                            # TB is tiny and static
        h = _gelu(_mm(w1, xn[i]) + b1)             # (S, D)
        rows.append(_mm(w2, h)[None])              # (1, N, D)
    tok = rows[0] if TB == 1 else jnp.concatenate(rows, axis=0)
    x = x + tok + b2_ref[...]                      # b2 block (1, N, D), lane-dense

    # --- channel mixing: one (TB*N, D) @ (D, C) matmul over all rows ---
    xn = _layernorm(x, g2_ref[0], be2_ref[0])      # (TB, N, D)
    xf = xn.reshape(TB * N, D)
    c = _gelu(_mm(xf, w3t_ref[0]) + b3_ref[0])     # (TB*N, C), bias (1, C)
    y = _mm(c, w4t_ref[0]) + b4_ref[0]             # (TB*N, D), bias (1, D)
    x = x + y.reshape(TB, N, D)

    acc_ref[...] = x

    @pl.when(d == pl.num_programs(1) - 1)
    def _():
        o_ref[...] = x.astype(o_ref.dtype)


def _classifier_kernel(x_ref, g_ref, be_ref, wt_ref, b_ref, o_ref):
    # LayerNorm -> mean over patches -> Linear, fused for the whole batch.
    x = x_ref[...].astype(jnp.float32)             # (B, N, D)
    xn = _layernorm(x, g_ref[...], be_ref[...])
    pooled = jnp.mean(xn, axis=1)                  # (B, D)
    o_ref[...] = (_mm(pooled, wt_ref[...]) + b_ref[...]).astype(o_ref.dtype)


# ------------------------------ wrapper / glue --------------------------------

def _extract_patches(x, patch_size):
    # einops Rearrange('b c (h p1) (w p2) -> b (h w) (p1 p2 c)') — pure layout glue.
    B, C, H, W = x.shape
    p = patch_size
    h, w = H // p, W // p
    x = x.reshape(B, C, h, p, w, p)
    x = jnp.transpose(x, (0, 2, 4, 3, 5, 1))
    return x.reshape(B, h * w, p * p * C)


def _run_embed(patches2d, wt, b):
    M, P = patches2d.shape
    D = wt.shape[1]
    # TODO(synk): at realistic Mixer sizes (B*N in the tens of thousands, D>=512),
    # tile over the row dimension and set vmem_limit_bytes instead of one full block.
    return pl.pallas_call(
        _embed_kernel,
        out_shape=jax.ShapeDtypeStruct((M, D), jnp.float32),
        grid=(1,),
        in_specs=[pl.BlockSpec((M, P), lambda i: (0, 0)),
                  pl.BlockSpec((P, D), lambda i: (0, 0)),
                  pl.BlockSpec((1, D), lambda i: (0, 0))],
        out_specs=pl.BlockSpec((M, D), lambda i: (0, 0)),
    )(patches2d, wt, b)


def _run_mixer_blocks(tok, bp, num_batch_tiles):
    B, N, D = tok.shape
    depth, S, _ = bp["w1"].shape
    C = bp["w3t"].shape[2]
    TB = B // num_batch_tiles
    wmap = lambda b, d: (d, 0, 0)   # per-depth block weights (prefetched/double-buffered)
    xmap = lambda b, d: (b, 0, 0)   # constant across depth -> no re-DMA of tokens
    return pl.pallas_call(
        _mixer_blocks_kernel,
        out_shape=jax.ShapeDtypeStruct((B, N, D), jnp.float32),
        grid=(num_batch_tiles, depth),
        in_specs=[
            pl.BlockSpec((TB, N, D), xmap),                                 # tokens
            pl.BlockSpec((1, 1, D), wmap), pl.BlockSpec((1, 1, D), wmap),   # ln1 g/b
            pl.BlockSpec((1, S, N), wmap), pl.BlockSpec((1, S, D), wmap),   # tok W1,b1
            pl.BlockSpec((1, N, S), wmap), pl.BlockSpec((1, N, D), wmap),   # tok W2,b2
            pl.BlockSpec((1, 1, D), wmap), pl.BlockSpec((1, 1, D), wmap),   # ln2 g/b
            pl.BlockSpec((1, D, C), wmap), pl.BlockSpec((1, 1, C), wmap),   # ch W3^T,b3
            pl.BlockSpec((1, C, D), wmap), pl.BlockSpec((1, 1, D), wmap),   # ch W4^T,b4
        ],
        out_specs=pl.BlockSpec((TB, N, D), xmap),
        scratch_shapes=[pltpu.VMEM((TB, N, D), jnp.float32)],
        compiler_params=pltpu.CompilerParams(
            dimension_semantics=("parallel", "arbitrary")),
    )(tok, bp["g1"], bp["be1"], bp["w1"], bp["b1"], bp["w2"], bp["b2"],
      bp["g2"], bp["be2"], bp["w3t"], bp["b3"], bp["w4t"], bp["b4"])


def _run_classifier(tok, cp):
    B, N, D = tok.shape
    K = cp["wt"].shape[1]
    return pl.pallas_call(
        _classifier_kernel,
        out_shape=jax.ShapeDtypeStruct((B, K), jnp.float32),
        grid=(1,),
        in_specs=[pl.BlockSpec((B, N, D), lambda i: (0, 0, 0)),
                  pl.BlockSpec((1, D), lambda i: (0, 0)),
                  pl.BlockSpec((1, D), lambda i: (0, 0)),
                  pl.BlockSpec((D, K), lambda i: (0, 0)),
                  pl.BlockSpec((1, K), lambda i: (0, 0))],
        out_specs=pl.BlockSpec((B, K), lambda i: (0, 0)),
    )(tok, cp["g"], cp["be"], cp["wt"], cp["b"])


def mixer_forward(x, packed, patch_size):
    """x: (B, C, H, W) float32 -> logits (B, num_classes)."""
    B = x.shape[0]
    patches = _extract_patches(x, patch_size)                # (B, N, P)
    _, N, P = patches.shape
    D = packed["embed"]["wt"].shape[1]
    tok = _run_embed(patches.reshape(B * N, P),
                     packed["embed"]["wt"], packed["embed"]["b"]).reshape(B, N, D)
    # Even number of batch tiles so the "parallel" axis splits across v7x's 2 TCs.
    num_batch_tiles = 2 if (B % 2 == 0 and B >= 2) else 1
    tok = _run_mixer_blocks(tok, packed["blocks"], num_batch_tiles)
    return _run_classifier(tok, packed["cls"])


# --------------------------- params (PyTorch layout) ---------------------------

def make_params(key, cfg):
    D, S, C = cfg["hidden_dim"], cfg["spatial_dim"], cfg["channel_dim"]
    N, P, K = cfg["num_patches"], cfg["patch_dim"], cfg["num_classes"]
    ks = iter(jax.random.split(key, 64))

    def nrm(shape, scale):
        return scale * jax.random.normal(next(ks), shape, dtype=jnp.float32)

    params = {
        "embed": {"w": nrm((D, P), 1.0 / math.sqrt(P)), "b": nrm((D,), 0.02)},
        "blocks": [],
        "cls": {"ln_g": 1.0 + nrm((D,), 0.02), "ln_b": nrm((D,), 0.02),
                "w": nrm((K, D), 1.0 / math.sqrt(D)), "b": nrm((K,), 0.02)},
    }
    for _ in range(cfg["depth"]):
        params["blocks"].append({
            "ln1_g": 1.0 + nrm((D,), 0.02), "ln1_b": nrm((D,), 0.02),
            "tok_w1": nrm((S, N), 1.0 / math.sqrt(N)), "tok_b1": nrm((S,), 0.02),
            "tok_w2": nrm((N, S), 1.0 / math.sqrt(S)), "tok_b2": nrm((N,), 0.02),
            "ln2_g": 1.0 + nrm((D,), 0.02), "ln2_b": nrm((D,), 0.02),
            "ch_w1": nrm((C, D), 1.0 / math.sqrt(D)), "ch_b1": nrm((C,), 0.02),
            "ch_w2": nrm((D, C), 1.0 / math.sqrt(C)), "ch_b2": nrm((D,), 0.02),
        })
    return params


def pack_params(params):
    # Fold all transposes / bias reshapes / lane-dense bias broadcasts once, outside
    # the kernels, and stack per-block params along a leading `depth` axis so the
    # fused block kernel can index them with the depth grid axis.
    D = params["embed"]["w"].shape[0]
    blocks = params["blocks"]
    S = blocks[0]["tok_w1"].shape[0]
    N = blocks[0]["tok_w2"].shape[0]
    C = blocks[0]["ch_w1"].shape[0]
    K = params["cls"]["w"].shape[0]

    def stack(fn):
        return jnp.stack([jnp.asarray(fn(b), jnp.float32) for b in blocks], axis=0)

    packed = {
        "embed": {"wt": jnp.asarray(params["embed"]["w"], jnp.float32).T,
                  "b": jnp.asarray(params["embed"]["b"], jnp.float32).reshape(1, D)},
        "blocks": {
            "g1":  stack(lambda b: b["ln1_g"].reshape(1, D)),
            "be1": stack(lambda b: b["ln1_b"].reshape(1, D)),
            "w1":  stack(lambda b: b["tok_w1"]),                                   # (S, N)
            "b1":  stack(lambda b: jnp.broadcast_to(b["tok_b1"].reshape(S, 1), (S, D))),
            "w2":  stack(lambda b: b["tok_w2"]),                                   # (N, S)
            "b2":  stack(lambda b: jnp.broadcast_to(b["tok_b2"].reshape(N, 1), (N, D))),
            "g2":  stack(lambda b: b["ln2_g"].reshape(1, D)),
            "be2": stack(lambda b: b["ln2_b"].reshape(1, D)),
            "w3t": stack(lambda b: b["ch_w1"].T),                                  # (D, C)
            "b3":  stack(lambda b: b["ch_b1"].reshape(1, C)),
            "w4t": stack(lambda b: b["ch_w2"].T),                                  # (C, D)
            "b4":  stack(lambda b: b["ch_b2"].reshape(1, D)),
        },
        "cls": {"g": jnp.asarray(params["cls"]["ln_g"], jnp.float32).reshape(1, D),
                "be": jnp.asarray(params["cls"]["ln_b"], jnp.float32).reshape(1, D),
                "wt": jnp.asarray(params["cls"]["w"], jnp.float32).T,
                "b": jnp.asarray(params["cls"]["b"], jnp.float32).reshape(1, K)},
    }
    return packed


# ----------------------------- numpy f64 reference -----------------------------

_np_erf = np.vectorize(math.erf)


def _np_gelu(x):
    return 0.5 * x * (1.0 + _np_erf(x / math.sqrt(2.0)))


def _np_ln(x, g, b, eps=_LN_EPS):
    mu = x.mean(-1, keepdims=True)
    var = ((x - mu) ** 2).mean(-1, keepdims=True)
    return (x - mu) / np.sqrt(var + eps) * g + b


def mixer_reference(x, params, patch_size):
    f64 = lambda a: np.asarray(a, np.float64)
    x = f64(x)
    B, C, H, W = x.shape
    p = patch_size
    h, w = H // p, W // p
    tok = x.reshape(B, C, h, p, w, p).transpose(0, 2, 4, 3, 5, 1).reshape(B, h * w, p * p * C)
    tok = tok @ f64(params["embed"]["w"]).T + f64(params["embed"]["b"])
    for blk in params["blocks"]:
        skip = tok
        xn = _np_ln(tok, f64(blk["ln1_g"]), f64(blk["ln1_b"]))
        hmid = _np_gelu(np.einsum("sn,bnd->bsd", f64(blk["tok_w1"]), xn)
                        + f64(blk["tok_b1"])[None, :, None])
        tok = (np.einsum("ns,bsd->bnd", f64(blk["tok_w2"]), hmid)
               + f64(blk["tok_b2"])[None, :, None]) + skip
        skip = tok
        xn = _np_ln(tok, f64(blk["ln2_g"]), f64(blk["ln2_b"]))
        cmid = _np_gelu(xn @ f64(blk["ch_w1"]).T + f64(blk["ch_b1"]))
        tok = cmid @ f64(blk["ch_w2"]).T + f64(blk["ch_b2"]) + skip
    xn = _np_ln(tok, f64(params["cls"]["ln_g"]), f64(params["cls"]["ln_b"]))
    pooled = xn.mean(axis=1)
    return pooled @ f64(params["cls"]["w"]).T + f64(params["cls"]["b"])


# ------------------------------------ main -------------------------------------

if __name__ == "__main__":
    # Small config consistent with the module: Mixer(image_size=16, patch_size=4,
    # num_classes=10, hidden_dim=32, spatial_dim=24, channel_dim=64, depth=2, channel=3)
    image_size, patch_size, channel = 16, 4, 3
    hidden_dim, spatial_dim, channel_dim = 32, 24, 64
    depth, num_classes, batch = 2, 10, 2
    num_patches = (image_size // patch_size) ** 2
    patch_dim = channel * patch_size ** 2

    key = jax.random.PRNGKey(0)
    kx, kp = jax.random.split(key)
    x = jax.random.normal(kx, (batch, channel, image_size, image_size), dtype=jnp.float32)

    params = make_params(kp, dict(hidden_dim=hidden_dim, spatial_dim=spatial_dim,
                                  channel_dim=channel_dim, num_patches=num_patches,
                                  patch_dim=patch_dim, num_classes=num_classes,
                                  depth=depth))
    packed = pack_params(params)

    fwd = jax.jit(lambda inp: mixer_forward(inp, packed, patch_size))
    logits = fwd(x)
    jax.block_until_ready(logits)

    ref = mixer_reference(np.asarray(x), params, patch_size)
    # Tolerance covers single-pass bf16 MXU matmuls (DEFAULT precision) and the
    # tanh-approximate GELU vs the exact-erf float64 reference.
    np.testing.assert_allclose(np.asarray(logits), ref, rtol=2e-2, atol=2e-2)
    print("KERNEL_OK")
</pallas_src>

<mosaic_0001>
module attributes {stable_mosaic.version = 11 : i64} {
  func.func @_mixer_blocks_kernel(%arg0: i32, %arg1: i32, %arg2: memref<1x16x32xf32, #tpu.memory_space<vmem>>, %arg3: memref<1x1x32xf32, #tpu.memory_space<vmem>>, %arg4: memref<1x1x32xf32, #tpu.memory_space<vmem>>, %arg5: memref<1x24x16xf32, #tpu.memory_space<vmem>>, %arg6: memref<1x24x32xf32, #tpu.memory_space<vmem>>, %arg7: memref<1x16x24xf32, #tpu.memory_space<vmem>>, %arg8: memref<1x16x32xf32, #tpu.memory_space<vmem>>, %arg9: memref<1x1x32xf32, #tpu.memory_space<vmem>>, %arg10: memref<1x1x32xf32, #tpu.memory_space<vmem>>, %arg11: memref<1x32x64xf32, #tpu.memory_space<vmem>>, %arg12: memref<1x1x64xf32, #tpu.memory_space<vmem>>, %arg13: memref<1x64x32xf32, #tpu.memory_space<vmem>>, %arg14: memref<1x1x32xf32, #tpu.memory_space<vmem>>, %arg15: memref<1x16x32xf32, #tpu.memory_space<vmem>>, %arg16: memref<1x16x32xf32, #tpu.memory_space<vmem>>) attributes {dimension_semantics = [#tpu.dimension_semantics<parallel>, #tpu.dimension_semantics<arbitrary>], iteration_bounds = array<i64: 2, 2>, scalar_prefetch = 0 : i64, scratch_operands = 1 : i64, tpu.core_type = #tpu.core_type<tc>, window_params = [{transform_indices = @transform_0, window_bounds = array<i64: 1, 16, 32>}, {transform_indices = @transform_1, window_bounds = array<i64: 1, 1, 32>}, {transform_indices = @transform_2, window_bounds = array<i64: 1, 1, 32>}, {transform_indices = @transform_3, window_bounds = array<i64: 1, 24, 16>}, {transform_indices = @transform_4, window_bounds = array<i64: 1, 24, 32>}, {transform_indices = @transform_5, window_bounds = array<i64: 1, 16, 24>}, {transform_indices = @transform_6, window_bounds = array<i64: 1, 16, 32>}, {transform_indices = @transform_7, window_bounds = array<i64: 1, 1, 32>}, {transform_indices = @transform_8, window_bounds = array<i64: 1, 1, 32>}, {transform_indices = @transform_9, window_bounds = array<i64: 1, 32, 64>}, {transform_indices = @transform_10, window_bounds = array<i64: 1, 1, 64>}, {transform_indices = @transform_11, window_bounds = array<i64: 1, 64, 32>}, {transform_indices = @transform_12, window_bounds = array<i64: 1, 1, 32>}, {transform_indices = @transform_13, window_bounds = array<i64: 1, 16, 32>}]} {
    %c0_i32 = arith.constant 0 : i32
    %0 = arith.cmpi eq, %arg1, %c0_i32 : i32
    %1 = arith.extui %0 : i1 to i32
    %c0_i32_0 = arith.constant 0 : i32
    %2 = arith.cmpi ne, %1, %c0_i32_0 : i32
    scf.if %2 {
      %c0_64 = arith.constant 0 : index
      %c0_65 = arith.constant 0 : index
      %c0_66 = arith.constant 0 : index
      %117 = vector.load %arg2[%c0_64, %c0_65, %c0_66] : memref<1x16x32xf32, #tpu.memory_space<vmem>>, vector<1x16x32xf32>
      %c0_67 = arith.constant 0 : index
      %c0_68 = arith.constant 0 : index
      %c0_69 = arith.constant 0 : index
      %118 = vector.load %arg16[%c0_67, %c0_68, %c0_69] : memref<1x16x32xf32, #tpu.memory_space<vmem>>, vector<1x16x32xf32>
      tpu.vector_store %arg16[%c0_67, %c0_68, %c0_69], %117 {strides = array<i32>} : memref<1x16x32xf32, #tpu.memory_space<vmem>>, vector<1x16x32xf32>,
    } else {
    }
    %c0 = arith.constant 0 : index
    %c0_1 = arith.constant 0 : index
    %c0_2 = arith.constant 0 : index
    %3 = vector.load %arg16[%c0, %c0_1, %c0_2] : memref<1x16x32xf32, #tpu.memory_space<vmem>>, vector<1x16x32xf32>
    %c0_3 = arith.constant 0 : index
    %c0_4 = arith.constant 0 : index
    %c0_5 = arith.constant 0 : index
    %4 = vector.load %arg3[%c0_3, %c0_4, %c0_5] : memref<1x1x32xf32, #tpu.memory_space<vmem>>, vector<1x1x32xf32>
    %5 = vector.shape_cast %4 : vector<1x1x32xf32> to vector<1x32xf32>
    %c0_6 = arith.constant 0 : index
    %c0_7 = arith.constant 0 : index
    %c0_8 = arith.constant 0 : index
    %6 = vector.load %arg4[%c0_6, %c0_7, %c0_8] : memref<1x1x32xf32, #tpu.memory_space<vmem>>, vector<1x1x32xf32>
    %7 = vector.shape_cast %6 : vector<1x1x32xf32> to vector<1x32xf32>
    %cst = arith.constant dense<0.000000e+00> : vector<1x16xf32>
    %8 = vector.multi_reduction <add>, %3, %cst [2] : vector<1x16x32xf32> to vector<1x16xf32>
    %9 = vector.shape_cast %8 : vector<1x16xf32> to vector<1x16x1xf32>
    %cst_9 = arith.constant 3.200000e+01 : f32
    %10 = vector.broadcast %cst_9 : f32 to vector<1x16x1xf32>
    %11 = arith.divf %9, %10 : vector<1x16x1xf32>
    %12 = vector.broadcast %11 : vector<1x16x1xf32> to vector<1x16x32xf32>
    %13 = arith.subf %3, %12 : vector<1x16x32xf32>
    %14 = arith.mulf %13, %13 : vector<1x16x32xf32>
    %cst_10 = arith.constant dense<0.000000e+00> : vector<1x16xf32>
    %15 = vector.multi_reduction <add>, %14, %cst_10 [2] : vector<1x16x32xf32> to vector<1x16xf32>
    %16 = vector.shape_cast %15 : vector<1x16xf32> to vector<1x16x1xf32>
    %cst_11 = arith.constant 3.200000e+01 : f32
    %17 = vector.broadcast %cst_11 : f32 to vector<1x16x1xf32>
    %18 = arith.divf %16, %17 : vector<1x16x1xf32>
    %cst_12 = arith.constant 9.99999974E-6 : f32
    %19 = vector.broadcast %cst_12 : f32 to vector<1x16x1xf32>
    %20 = arith.addf %18, %19 : vector<1x16x1xf32>
    %21 = math.rsqrt %20 : vector<1x16x1xf32>
    %22 = vector.broadcast %21 : vector<1x16x1xf32> to vector<1x16x32xf32>
    %23 = arith.mulf %13, %22 : vector<1x16x32xf32>
    %24 = vector.shape_cast %5 : vector<1x32xf32> to vector<1x1x32xf32>
    %25 = vector.broadcast %24 : vector<1x1x32xf32> to vector<1x16x32xf32>
    %26 = arith.mulf %23, %25 : vector<1x16x32xf32>
    %27 = vector.shape_cast %7 : vector<1x32xf32> to vector<1x1x32xf32>
    %28 = vector.broadcast %27 : vector<1x1x32xf32> to vector<1x16x32xf32>
    %29 = arith.addf %26, %28 : vector<1x16x32xf32>
    %c0_13 = arith.constant 0 : index
    %c0_14 = arith.constant 0 : index
    %c0_15 = arith.constant 0 : index
    %30 = vector.load %arg5[%c0_13, %c0_14, %c0_15] : memref<1x24x16xf32, #tpu.memory_space<vmem>>, vector<1x24x16xf32>
    %31 = vector.shape_cast %30 : vector<1x24x16xf32> to vector<24x16xf32>
    %c0_16 = arith.constant 0 : index
    %c0_17 = arith.constant 0 : index
    %c0_18 = arith.constant 0 : index
    %32 = vector.load %arg6[%c0_16, %c0_17, %c0_18] : memref<1x24x32xf32, #tpu.memory_space<vmem>>, vector<1x24x32xf32>
    %33 = vector.shape_cast %32 : vector<1x24x32xf32> to vector<24x32xf32>
    %c0_19 = arith.constant 0 : index
    %c0_20 = arith.constant 0 : index
    %c0_21 = arith.constant 0 : index
    %34 = vector.load %arg7[%c0_19, %c0_20, %c0_21] : memref<1x16x24xf32, #tpu.memory_space<vmem>>, vector<1x16x24xf32>
    %35 = vector.shape_cast %34 : vector<1x16x24xf32> to vector<16x24xf32>
    %36 = vector.shape_cast %29 : vector<1x16x32xf32> to vector<16x32xf32>
    %cst_22 = arith.constant dense<0.000000e+00> : vector<24x32xf32>
    %37 = tpu.matmul %31, %36, %cst_22 {dimension_numbers = #tpu.dot_dimension_numbers<[1], [0], [0], [1], [0, 0, 1, 1], [], []>} : vector<24x16xf32>, vector<16x32xf32>, vector<24x32xf32> -> vector<24x32xf32>
    %38 = arith.addf %37, %33 : vector<24x32xf32>
    %cst_23 = arith.constant 5.000000e-01 : f32
    %39 = vector.broadcast %cst_23 : f32 to vector<24x32xf32>
    %40 = arith.mulf %39, %38 : vector<24x32xf32>
    %cst_24 = arith.constant 4.471500e-02 : f32
    %41 = vector.broadcast %cst_24 : f32 to vector<24x32xf32>
    %42 = arith.mulf %41, %38 : vector<24x32xf32>
    %43 = arith.mulf %42, %38 : vector<24x32xf32>
    %44 = arith.mulf %43, %38 : vector<24x32xf32>
    %45 = arith.addf %38, %44 : vector<24x32xf32>
    %cst_25 = arith.constant 0.797884583 : f32
    %46 = vector.broadcast %cst_25 : f32 to vector<24x32xf32>
    %47 = arith.mulf %46, %45 : vector<24x32xf32>
    %48 = math.tanh %47 : vector<24x32xf32>
    %cst_26 = arith.constant 1.000000e+00 : f32
    %49 = vector.broadcast %cst_26 : f32 to vector<24x32xf32>
    %50 = arith.addf %49, %48 : vector<24x32xf32>
    %51 = arith.mulf %40, %50 : vector<24x32xf32>
    %cst_27 = arith.constant dense<0.000000e+00> : vector<16x32xf32>
    %52 = tpu.matmul %35, %51, %cst_27 {dimension_numbers = #tpu.dot_dimension_numbers<[1], [0], [0], [1], [0, 0, 1, 1], [], []>} : vector<16x24xf32>, vector<24x32xf32>, vector<16x32xf32> -> vector<16x32xf32>
    %53 = vector.shape_cast %52 : vector<16x32xf32> to vector<1x16x32xf32>
    %54 = arith.addf %3, %53 : vector<1x16x32xf32>
    %c0_28 = arith.constant 0 : index
    %c0_29 = arith.constant 0 : index
    %c0_30 = arith.constant 0 : index
    %55 = vector.load %arg8[%c0_28, %c0_29, %c0_30] : memref<1x16x32xf32, #tpu.memory_space<vmem>>, vector<1x16x32xf32>
    %56 = arith.addf %54, %55 : vector<1x16x32xf32>
    %c0_31 = arith.constant 0 : index
    %c0_32 = arith.constant 0 : index
    %c0_33 = arith.constant 0 : index
    %57 = vector.load %arg9[%c0_31, %c0_32, %c0_33] : memref<1x1x32xf32, #tpu.memory_space<vmem>>, vector<1x1x32xf32>
    %58 = vector.shape_cast %57 : vector<1x1x32xf32> to vector<1x32xf32>
    %c0_34 = arith.constant 0 : index
    %c0_35 = arith.constant 0 : index
    %c0_36 = arith.constant 0 : index
    %59 = vector.load %arg10[%c0_34, %c0_35, %c0_36] : memref<1x1x32xf32, #tpu.memory_space<vmem>>, vector<1x1x32xf32>
    %60 = vector.shape_cast %59 : vector<1x1x32xf32> to vector<1x32xf32>
    %cst_37 = arith.constant dense<0.000000e+00> : vector<1x16xf32>
    %61 = vector.multi_reduction <add>, %56, %cst_37 [2] : vector<1x16x32xf32> to vector<1x16xf32>
    %62 = vector.shape_cast %61 : vector<1x16xf32> to vector<1x16x1xf32>
    %cst_38 = arith.constant 3.200000e+01 : f32
    %63 = vector.broadcast %cst_38 : f32 to vector<1x16x1xf32>
    %64 = arith.divf %62, %63 : vector<1x16x1xf32>
    %65 = vector.broadcast %64 : vector<1x16x1xf32> to vector<1x16x32xf32>
    %66 = arith.subf %56, %65 : vector<1x16x32xf32>
    %67 = arith.mulf %66, %66 : vector<1x16x32xf32>
    %cst_39 = arith.constant dense<0.000000e+00> : vector<1x16xf32>
    %68 = vector.multi_reduction <add>, %67, %cst_39 [2] : vector<1x16x32xf32> to vector<1x16xf32>
    %69 = vector.shape_cast %68 : vector<1x16xf32> to vector<1x16x1xf32>
    %cst_40 = arith.constant 3.200000e+01 : f32
    %70 = vector.broadcast %cst_40 : f32 to vector<1x16x1xf32>
    %71 = arith.divf %69, %70 : vector<1x16x1xf32>
    %cst_41 = arith.constant 9.99999974E-6 : f32
    %72 = vector.broadcast %cst_41 : f32 to vector<1x16x1xf32>
    %73 = arith.addf %71, %72 : vector<1x16x1xf32>
    %74 = math.rsqrt %73 : vector<1x16x1xf32>
    %75 = vector.broadcast %74 : vector<1x16x1xf32> to vector<1x16x32xf32>
    %76 = arith.mulf %66, %75 : vector<1x16x32xf32>
    %77 = vector.shape_cast %58 : vector<1x32xf32> to vector<1x1x32xf32>
    %78 = vector.broadcast %77 : vector<1x1x32xf32> to vector<1x16x32xf32>
    %79 = arith.mulf %76, %78 : vector<1x16x32xf32>
    %80 = vector.shape_cast %60 : vector<1x32xf32> to vector<1x1x32xf32>
    %81 = vector.broadcast %80 : vector<1x1x32xf32> to vector<1x16x32xf32>
    %82 = arith.addf %79, %81 : vector<1x16x32xf32>
    %83 = vector.shape_cast %82 : vector<1x16x32xf32> to vector<16x32xf32>
    %c0_42 = arith.constant 0 : index
    %c0_43 = arith.constant 0 : index
    %c0_44 = arith.constant 0 : index
    %84 = vector.load %arg11[%c0_42, %c0_43, %c0_44] : memref<1x32x64xf32, #tpu.memory_space<vmem>>, vector<1x32x64xf32>
    %85 = vector.shape_cast %84 : vector<1x32x64xf32> to vector<32x64xf32>
    %cst_45 = arith.constant dense<0.000000e+00> : vector<16x64xf32>
    %86 = tpu.matmul %83, %85, %cst_45 {dimension_numbers = #tpu.dot_dimension_numbers<[1], [0], [0], [1], [0, 0, 1, 1], [], []>} : vector<16x32xf32>, vector<32x64xf32>, vector<16x64xf32> -> vector<16x64xf32>
    %c0_46 = arith.constant 0 : index
    %c0_47 = arith.constant 0 : index
    %c0_48 = arith.constant 0 : index
    %87 = vector.load %arg12[%c0_46, %c0_47, %c0_48] : memref<1x1x64xf32, #tpu.memory_space<vmem>>, vector<1x1x64xf32>
    %88 = vector.shape_cast %87 : vector<1x1x64xf32> to vector<1x64xf32>
    %89 = vector.broadcast %88 : vector<1x64xf32> to vector<16x64xf32>
    %90 = arith.addf %86, %89 : vector<16x64xf32>
    %cst_49 = arith.constant 5.000000e-01 : f32
    %91 = vector.broadcast %cst_49 : f32 to vector<16x64xf32>
    %92 = arith.mulf %91, %90 : vector<16x64xf32>
    %cst_50 = arith.constant 4.471500e-02 : f32
    %93 = vector.broadcast %cst_50 : f32 to vector<16x64xf32>
    %94 = arith.mulf %93, %90 : vector<16x64xf32>
    %95 = arith.mulf %94, %90 : vector<16x64xf32>
    %96 = arith.mulf %95, %90 : vector<16x64xf32>
    %97 = arith.addf %90, %96 : vector<16x64xf32>
    %cst_51 = arith.constant 0.797884583 : f32
    %98 = vector.broadcast %cst_51 : f32 to vector<16x64xf32>
    %99 = arith.mulf %98, %97 : vector<16x64xf32>
    %100 = math.tanh %99 : vector<16x64xf32>
    %cst_52 = arith.constant 1.000000e+00 : f32
    %101 = vector.broadcast %cst_52 : f32 to vector<16x64xf32>
    %102 = arith.addf %101, %100 : vector<16x64xf32>
    %103 = arith.mulf %92, %102 : vector<16x64xf32>
    %c0_53 = arith.constant 0 : index
    %c0_54 = arith.constant 0 : index
    %c0_55 = arith.constant 0 : index
    %104 = vector.load %arg13[%c0_53, %c0_54, %c0_55] : memref<1x64x32xf32, #tpu.memory_space<vmem>>, vector<1x64x32xf32>
    %105 = vector.shape_cast %104 : vector<1x64x32xf32> to vector<64x32xf32>
    %cst_56 = arith.constant dense<0.000000e+00> : vector<16x32xf32>
    %106 = tpu.matmul %103, %105, %cst_56 {dimension_numbers = #tpu.dot_dimension_numbers<[1], [0], [0], [1], [0, 0, 1, 1], [], []>} : vector<16x64xf32>, vector<64x32xf32>, vector<16x32xf32> -> vector<16x32xf32>
    %c0_57 = arith.constant 0 : index
    %c0_58 = arith.constant 0 : index
    %c0_59 = arith.constant 0 : index
    %107 = vector.load %arg14[%c0_57, %c0_58, %c0_59] : memref<1x1x32xf32, #tpu.memory_space<vmem>>, vector<1x1x32xf32>
    %108 = vector.shape_cast %107 : vector<1x1x32xf32> to vector<1x32xf32>
    %109 = vector.broadcast %108 : vector<1x32xf32> to vector<16x32xf32>
    %110 = arith.addf %106, %109 : vector<16x32xf32>
    %111 = vector.shape_cast %110 : vector<16x32xf32> to vector<1x16x32xf32>
    %112 = arith.addf %56, %111 : vector<1x16x32xf32>
    %c0_60 = arith.constant 0 : index
    %c0_61 = arith.constant 0 : index
    %c0_62 = arith.constant 0 : index
    %113 = vector.load %arg16[%c0_60, %c0_61, %c0_62] : memref<1x16x32xf32, #tpu.memory_space<vmem>>, vector<1x16x32xf32>
    tpu.vector_store %arg16[%c0_60, %c0_61, %c0_62], %112 {strides = array<i32>} : memref<1x16x32xf32, #tpu.memory_space<vmem>>, vector<1x16x32xf32>,
    %c1_i32 = arith.constant 1 : i32
    %114 = arith.cmpi eq, %arg1, %c1_i32 : i32
    %115 = arith.extui %114 : i1 to i32
    %c0_i32_63 = arith.constant 0 : i32
    %116 = arith.cmpi ne, %115, %c0_i32_63 : i32
    scf.if %116 {
      %c0_64 = arith.constant 0 : index
      %c0_65 = arith.constant 0 : index
      %c0_66 = arith.constant 0 : index
      %117 = vector.load %arg15[%c0_64, %c0_65, %c0_66] : memref<1x16x32xf32, #tpu.memory_space<vmem>>, vector<1x16x32xf32>
      tpu.vector_store %arg15[%c0_64, %c0_65, %c0_66], %112 {strides = array<i32>} : memref<1x16x32xf32, #tpu.memory_space<vmem>>, vector<1x16x32xf32>,
    } else {
    }
    return
  }
  func.func @transform_0(%arg0: i32, %arg1: i32) -> (i32, i32, i32) {
    %c0_i32 = arith.constant 0 : i32
    %c0_i32_0 = arith.constant 0 : i32
    %c0_i32_1 = arith.constant 0 : i32
    return %arg0, %c0_i32, %c0_i32_0 : i32, i32, i32
  }
  func.func @transform_1(%arg0: i32, %arg1: i32) -> (i32, i32, i32) {
    %c0_i32 = arith.constant 0 : i32
    %c0_i32_0 = arith.constant 0 : i32
    %c0_i32_1 = arith.constant 0 : i32
    return %arg1, %c0_i32, %c0_i32_0 : i32, i32, i32
  }
  func.func @transform_2(%arg0: i32, %arg1: i32) -> (i32, i32, i32) {
    %c0_i32 = arith.constant 0 : i32
    %c0_i32_0 = arith.constant 0 : i32
    %c0_i32_1 = arith.constant 0 : i32
    return %arg1, %c0_i32, %c0_i32_0 : i32, i32, i32
  }
  func.func @transform_3(%arg0: i32, %arg1: i32) -> (i32, i32, i32) {
    %c0_i32 = arith.constant 0 : i32
    %c0_i32_0 = arith.constant 0 : i32
    %c0_i32_1 = arith.constant 0 : i32
    return %arg1, %c0_i32, %c0_i32_0 : i32, i32, i32
  }
  func.func @transform_4(%arg0: i32, %arg1: i32) -> (i32, i32, i32) {
    %c0_i32 = arith.constant 0 : i32
    %c0_i32_0 = arith.constant 0 : i32
    %c0_i32_1 = arith.constant 0 : i32
    return %arg1, %c0_i32, %c0_i32_0 : i32, i32, i32
  }
  func.func @transform_5(%arg0: i32, %arg1: i32) -> (i32, i32, i32) {
    %c0_i32 = arith.constant 0 : i32
    %c0_i32_0 = arith.constant 0 : i32
    %c0_i32_1 = arith.constant 0 : i32
    return %arg1, %c0_i32, %c0_i32_0 : i32, i32, i32
  }
  func.func @transform_6(%arg0: i32, %arg1: i32) -> (i32, i32, i32) {
    %c0_i32 = arith.constant 0 : i32
    %c0_i32_0 = arith.constant 0 : i32
    %c0_i32_1 = arith.constant 0 : i32
    return %arg1, %c0_i32, %c0_i32_0 : i32, i32, i32
  }
  func.func @transform_7(%arg0: i32, %arg1: i32) -> (i32, i32, i32) {
    %c0_i32 = arith.constant 0 : i32
    %c0_i32_0 = arith.constant 0 : i32
    %c0_i32_1 = arith.constant 0 : i32
    return %arg1, %c0_i32, %c0_i32_0 : i32, i32, i32
  }
  func.func @transform_8(%arg0: i32, %arg1: i32) -> (i32, i32, i32) {
    %c0_i32 = arith.constant 0 : i32
    %c0_i32_0 = arith.constant 0 : i32
    %c0_i32_1 = arith.constant 0 : i32
    return %arg1, %c0_i32, %c0_i32_0 : i32, i32, i32
  }
  func.func @transform_9(%arg0: i32, %arg1: i32) -> (i32, i32, i32) {
    %c0_i32 = arith.constant 0 : i32
    %c0_i32_0 = arith.constant 0 : i32
    %c0_i32_1 = arith.constant 0 : i32
    return %arg1, %c0_i32, %c0_i32_0 : i32, i32, i32
  }
  func.func @transform_10(%arg0: i32, %arg1: i32) -> (i32, i32, i32) {
    %c0_i32 = arith.constant 0 : i32
    %c0_i32_0 = arith.constant 0 : i32
    %c0_i32_1 = arith.constant 0 : i32
    return %arg1, %c0_i32, %c0_i32_0 : i32, i32, i32
  }
  func.func @transform_11(%arg0: i32, %arg1: i32) -> (i32, i32, i32) {
    %c0_i32 = arith.constant 0 : i32
    %c0_i32_0 = arith.constant 0 : i32
    %c0_i32_1 = arith.constant 0 : i32
    return %arg1, %c0_i32, %c0_i32_0 : i32, i32, i32
  }
  func.func @transform_12(%arg0: i32, %arg1: i32) -> (i32, i32, i32) {
    %c0_i32 = arith.constant 0 : i32
    %c0_i32_0 = arith.constant 0 : i32
    %c0_i32_1 = arith.constant 0 : i32
    return %arg1, %c0_i32, %c0_i32_0 : i32, i32, i32
  }
  func.func @transform_13(%arg0: i32, %arg1: i32) -> (i32, i32, i32) {
    %c0_i32 = arith.constant 0 : i32
    %c0_i32_0 = arith.constant 0 : i32
    %c0_i32_1 = arith.constant 0 : i32
    return %arg0, %c0_i32, %c0_i32_0 : i32, i32, i32
  }
}

module attributes {stable_mosaic.version = 11 : i64} {
  func.func @_embed_kernel(%arg0: i32, %arg1: memref<32x48xf32, #tpu.memory_space<vmem>>, %arg2: memref<48x32xf32, #tpu.memory_space<vmem>>, %arg3: memref<1x32xf32, #tpu.memory_space<vmem>>, %arg4: memref<32x32xf32, #tpu.memory_space<vmem>>) attributes {dimension_semantics = [#tpu.dimension_semantics<arbitrary>], iteration_bounds = array<i64: 1>, scalar_prefetch = 0 : i64, scratch_operands = 0 : i64, tpu.core_type = #tpu.core_type<tc>, window_params = [{pipeline_mode = #tpu.pipeline_mode<synchronous>, transform_indices = @transform_0, window_bounds = array<i64: 32, 48>}, {pipeline_mode = #tpu.pipeline_mode<synchronous>, transform_indices = @transform_1, window_bounds = array<i64: 48, 32>}, {pipeline_mode = #tpu.pipeline_mode<synchronous>, transform_indices = @transform_2, window_bounds = array<i64: 1, 32>}, {pipeline_mode = #tpu.pipeline_mode<synchronous>, transform_indices = @transform_3, window_bounds = array<i64: 32, 32>}]} {
    %c0 = arith.constant 0 : index
    %c0_0 = arith.constant 0 : index
    %0 = vector.load %arg1[%c0, %c0_0] : memref<32x48xf32, #tpu.memory_space<vmem>>, vector<32x48xf32>
    %c0_1 = arith.constant 0 : index
    %c0_2 = arith.constant 0 : index
    %1 = vector.load %arg2[%c0_1, %c0_2] : memref<48x32xf32, #tpu.memory_space<vmem>>, vector<48x32xf32>
    %cst = arith.constant dense<0.000000e+00> : vector<32x32xf32>
    %2 = tpu.matmul %0, %1, %cst {dimension_numbers = #tpu.dot_dimension_numbers<[1], [0], [0], [1], [0, 0, 1, 1], [], []>} : vector<32x48xf32>, vector<48x32xf32>, vector<32x32xf32> -> vector<32x32xf32>
    %c0_3 = arith.constant 0 : index
    %c0_4 = arith.constant 0 : index
    %3 = vector.load %arg3[%c0_3, %c0_4] : memref<1x32xf32, #tpu.memory_space<vmem>>, vector<1x32xf32>
    %4 = vector.broadcast %3 : vector<1x32xf32> to vector<32x32xf32>
    %5 = arith.addf %2, %4 : vector<32x32xf32>
    %c0_5 = arith.constant 0 : index
    %c0_6 = arith.constant 0 : index
    %6 = vector.load %arg4[%c0_5, %c0_6] : memref<32x32xf32, #tpu.memory_space<vmem>>, vector<32x32xf32>
    tpu.vector_store %arg4[%c0_5, %c0_6], %5 {strides = array<i32>} : memref<32x32xf32, #tpu.memory_space<vmem>>, vector<32x32xf32>,
    return
  }
  func.func @transform_0(%arg0: i32) -> (i32, i32) {
    %c0_i32 = arith.constant 0 : i32
    %c0_i32_0 = arith.constant 0 : i32
    %c0_i32_1 = arith.constant 0 : i32
    return %c0_i32, %c0_i32_0 : i32, i32
  }
  func.func @transform_1(%arg0: i32) -> (i32, i32) {
    %c0_i32 = arith.constant 0 : i32
    %c0_i32_0 = arith.constant 0 : i32
    %c0_i32_1 = arith.constant 0 : i32
    return %c0_i32, %c0_i32_0 : i32, i32
  }
  func.func @transform_2(%arg0: i32) -> (i32, i32) {
    %c0_i32 = arith.constant 0 : i32
    %c0_i32_0 = arith.constant 0 : i32
    %c0_i32_1 = arith.constant 0 : i32
    return %c0_i32, %c0_i32_0 : i32, i32
  }
  func.func @transform_3(%arg0: i32) -> (i32, i32) {
    %c0_i32 = arith.constant 0 : i32
    %c0_i32_0 = arith.constant 0 : i32
    %c0_i32_1 = arith.constant 0 : i32
    return %c0_i32, %c0_i32_0 : i32, i32
  }
}

module attributes {stable_mosaic.version = 11 : i64} {
  func.func @_classifier_kernel(%arg0: i32, %arg1: memref<2x16x32xf32, #tpu.memory_space<vmem>>, %arg2: memref<1x32xf32, #tpu.memory_space<vmem>>, %arg3: memref<1x32xf32, #tpu.memory_space<vmem>>, %arg4: memref<32x10xf32, #tpu.memory_space<vmem>>, %arg5: memref<1x10xf32, #tpu.memory_space<vmem>>, %arg6: memref<2x10xf32, #tpu.memory_space<vmem>>) attributes {dimension_semantics = [#tpu.dimension_semantics<arbitrary>], iteration_bounds = array<i64: 1>, scalar_prefetch = 0 : i64, scratch_operands = 0 : i64, tpu.core_type = #tpu.core_type<tc>, window_params = [{pipeline_mode = #tpu.pipeline_mode<synchronous>, transform_indices = @transform_0, window_bounds = array<i64: 2, 16, 32>}, {pipeline_mode = #tpu.pipeline_mode<synchronous>, transform_indices = @transform_1, window_bounds = array<i64: 1, 32>}, {pipeline_mode = #tpu.pipeline_mode<synchronous>, transform_indices = @transform_2, window_bounds = array<i64: 1, 32>}, {pipeline_mode = #tpu.pipeline_mode<synchronous>, transform_indices = @transform_3, window_bounds = array<i64: 32, 10>}, {pipeline_mode = #tpu.pipeline_mode<synchronous>, transform_indices = @transform_4, window_bounds = array<i64: 1, 10>}, {pipeline_mode = #tpu.pipeline_mode<synchronous>, transform_indices = @transform_5, window_bounds = array<i64: 2, 10>}]} {
    %c0 = arith.constant 0 : index
    %c0_0 = arith.constant 0 : index
    %c0_1 = arith.constant 0 : index
    %0 = vector.load %arg1[%c0, %c0_0, %c0_1] : memref<2x16x32xf32, #tpu.memory_space<vmem>>, vector<2x16x32xf32>
    %c0_2 = arith.constant 0 : index
    %c0_3 = arith.constant 0 : index
    %1 = vector.load %arg2[%c0_2, %c0_3] : memref<1x32xf32, #tpu.memory_space<vmem>>, vector<1x32xf32>
    %c0_4 = arith.constant 0 : index
    %c0_5 = arith.constant 0 : index
    %2 = vector.load %arg3[%c0_4, %c0_5] : memref<1x32xf32, #tpu.memory_space<vmem>>, vector<1x32xf32>
    %cst = arith.constant dense<0.000000e+00> : vector<2x16xf32>
    %3 = vector.multi_reduction <add>, %0, %cst [2] : vector<2x16x32xf32> to vector<2x16xf32>
    %4 = vector.shape_cast %3 : vector<2x16xf32> to vector<2x16x1xf32>
    %cst_6 = arith.constant 3.200000e+01 : f32
    %5 = vector.broadcast %cst_6 : f32 to vector<2x16x1xf32>
    %6 = arith.divf %4, %5 : vector<2x16x1xf32>
    %7 = vector.broadcast %6 : vector<2x16x1xf32> to vector<2x16x32xf32>
    %8 = arith.subf %0, %7 : vector<2x16x32xf32>
    %9 = arith.mulf %8, %8 : vector<2x16x32xf32>
    %cst_7 = arith.constant dense<0.000000e+00> : vector<2x16xf32>
    %10 = vector.multi_reduction <add>, %9, %cst_7 [2] : vector<2x16x32xf32> to vector<2x16xf32>
    %11 = vector.shape_cast %10 : vector<2x16xf32> to vector<2x16x1xf32>
    %cst_8 = arith.constant 3.200000e+01 : f32
    %12 = vector.broadcast %cst_8 : f32 to vector<2x16x1xf32>
    %13 = arith.divf %11, %12 : vector<2x16x1xf32>
    %cst_9 = arith.constant 9.99999974E-6 : f32
    %14 = vector.broadcast %cst_9 : f32 to vector<2x16x1xf32>
    %15 = arith.addf %13, %14 : vector<2x16x1xf32>
    %16 = math.rsqrt %15 : vector<2x16x1xf32>
    %17 = vector.broadcast %16 : vector<2x16x1xf32> to vector<2x16x32xf32>
    %18 = arith.mulf %8, %17 : vector<2x16x32xf32>
    %19 = vector.shape_cast %1 : vector<1x32xf32> to vector<1x1x32xf32>
    %20 = vector.broadcast %19 : vector<1x1x32xf32> to vector<2x16x32xf32>
    %21 = arith.mulf %18, %20 : vector<2x16x32xf32>
    %22 = vector.shape_cast %2 : vector<1x32xf32> to vector<1x1x32xf32>
    %23 = vector.broadcast %22 : vector<1x1x32xf32> to vector<2x16x32xf32>
    %24 = arith.addf %21, %23 : vector<2x16x32xf32>
    %cst_10 = arith.constant dense<0.000000e+00> : vector<2x32xf32>
    %25 = vector.multi_reduction <add>, %24, %cst_10 [1] : vector<2x16x32xf32> to vector<2x32xf32>
    %cst_11 = arith.constant 1.600000e+01 : f32
    %26 = vector.broadcast %cst_11 : f32 to vector<2x32xf32>
    %27 = arith.divf %25, %26 : vector<2x32xf32>
    %c0_12 = arith.constant 0 : index
    %c0_13 = arith.constant 0 : index
    %28 = vector.load %arg4[%c0_12, %c0_13] : memref<32x10xf32, #tpu.memory_space<vmem>>, vector<32x10xf32>
    %cst_14 = arith.constant dense<0.000000e+00> : vector<2x10xf32>
    %29 = tpu.matmul %27, %28, %cst_14 {dimension_numbers = #tpu.dot_dimension_numbers<[1], [0], [0], [1], [0, 0, 1, 1], [], []>} : vector<2x32xf32>, vector<32x10xf32>, vector<2x10xf32> -> vector<2x10xf32>
    %c0_15 = arith.constant 0 : index
    %c0_16 = arith.constant 0 : index
    %30 = vector.load %arg5[%c0_15, %c0_16] : memref<1x10xf32, #tpu.memory_space<vmem>>, vector<1x10xf32>
    %31 = vector.broadcast %30 : vector<1x10xf32> to vector<2x10xf32>
    %32 = arith.addf %29, %31 : vector<2x10xf32>
    %c0_17 = arith.constant 0 : index
    %c0_18 = arith.constant 0 : index
    %33 = vector.load %arg6[%c0_17, %c0_18] : memref<2x10xf32, #tpu.memory_space<vmem>>, vector<2x10xf32>
    tpu.vector_store %arg6[%c0_17, %c0_18], %32 {strides = array<i32>} : memref<2x10xf32, #tpu.memory_space<vmem>>, vector<2x10xf32>,
    return
  }
  func.func @transform_0(%arg0: i32) -> (i32, i32, i32) {
    %c0_i32 = arith.constant 0 : i32
    %c0_i32_0 = arith.constant 0 : i32
    %c0_i32_1 = arith.constant 0 : i32
    %c0_i32_2 = arith.constant 0 : i32
    return %c0_i32, %c0_i32_0, %c0_i32_1 : i32, i32, i32
  }
  func.func @transform_1(%arg0: i32) -> (i32, i32) {
    %c0_i32 = arith.constant 0 : i32
    %c0_i32_0 = arith.constant 0 : i32
    %c0_i32_1 = arith.constant 0 : i32
    return %c0_i32, %c0_i32_0 : i32, i32
  }
  func.func @transform_2(%arg0: i32) -> (i32, i32) {
    %c0_i32 = arith.constant 0 : i32
    %c0_i32_0 = arith.constant 0 : i32
    %c0_i32_1 = arith.constant 0 : i32
    return %c0_i32, %c0_i32_0 : i32, i32
  }
  func.func @transform_3(%arg0: i32) -> (i32, i32) {
    %c0_i32 = arith.constant 0 : i32
    %c0_i32_0 = arith.constant 0 : i32
    %c0_i32_1 = arith.constant 0 : i32
    return %c0_i32, %c0_i32_0 : i32, i32
  }
  func.func @transform_4(%arg0: i32) -> (i32, i32) {
    %c0_i32 = arith.constant 0 : i32
    %c0_i32_0 = arith.constant 0 : i32
    %c0_i32_1 = arith.constant 0 : i32
    return %c0_i32, %c0_i32_0 : i32, i32
  }
  func.func @transform_5(%arg0: i32) -> (i32, i32) {
    %c0_i32 = arith.constant 0 : i32
    %c0_i32_0 = arith.constant 0 : i32
    %c0_i32_1 = arith.constant 0 : i32
    return %c0_i32, %c0_i32_0 : i32, i32
  }
}

</mosaic_0001>

<llo_original>
// kernel: _lambda_.3
$region0: #{_lambda_.3}
  #allocation0 [shape = 'u32[]', space=smem, size = 0x4, offset = 0x4, fixed_abs, tag = 'smem constant byte address 0x4 - core index']
  #allocation1 [shape = 'u32[72,128]{1,0:T(1,128)}', space=vmem, size = 0x9000, scoped, tag = 'internal scratch']
  %s0 = inlined_call_operand.vmem [shape: f32[32,48], index: 0, kind: input, shape index: {}]
  %s1 = inlined_call_operand.vmem [shape: f32[48,32], index: 1, kind: input, shape index: {}]
  %s2 = inlined_call_operand.vmem [shape: f32[1,32], index: 2, kind: input, shape index: {}]
  %s3 = inlined_call_operand.vmem [shape: f32[32,32], index: 3, kind: output, shape index: {}]
  %s4 = sld [smem:[#allocation0]]
  $region22: #{_lambda_.3} parent=0
    _
  %s6 = ssub.s32 1, %s4
  %s7 = scalar_select 0, %s6, %s4
  // Predicated region
  $region2: #{_lambda_.3} parent=0 // pred_check
    _
  $region3: #{_lambda_.3} parent=0 // pred_check_branch
    %9 = sbr.rel (0) target = $region5
  $region4: #{_lambda_.3} parent=0 // pred_region
    _
  $region5: #{_lambda_.3} parent=0 // pred_fallthru
    _
  // Predicated region
  $region6: #{_lambda_.3} parent=0 // pred_check
    _
  $region7: #{_lambda_.3} parent=0 // pred_check_branch
    %11 = sbr.rel (0) target = $region9
  $region8: #{_lambda_.3} parent=0 // pred_region
    _
  $region9: #{_lambda_.3} parent=0 // pred_fallthru
    _
  // Predicated region
  $region10: #{_lambda_.3} parent=0 // pred_check
    _
  $region11: #{_lambda_.3} parent=0 // pred_check_branch
    %13 = sbr.rel (0) target = $region13
  $region12: #{_lambda_.3} parent=0 // pred_region
    _
  $region13: #{_lambda_.3} parent=0 // pred_fallthru
    _
  %v14 = vld [vmem:[%s0] sm:$0xff]
  %v15 = vld [vmem:[%s0 + $0x8] sm:$0xff]
  %v16 = vld [vmem:[%s0 + $0x10] sm:$0xff]
  %v17 = vld [vmem:[%s0 + $0x18] sm:$0xff]
  %v18 = vld [vmem:[%s1] sm:$0xff]
  %v19 = vld [vmem:[%s1 + $0x8] sm:$0xff]
  %v20 = vld [vmem:[%s1 + $0x10] sm:$0xff]
  %v21 = vld [vmem:[%s1 + $0x18] sm:$0xff]
  %v22 = vld [vmem:[%s1 + $0x20] sm:$0xff]
  %v23 = vld [vmem:[%s1 + $0x28] sm:$0xff]
  %v24 = vld [vmem:[%s2] sm:$0x1]
  %v26 = vperm.slane %v24, 0
  %vm28 = vcmask 392192
  %v30 = vsel %vm28, %v14, 0
  %v33 = vsel %vm28, %v15, 0
  %v36 = vsel %vm28, %v16, 0
  %v39 = vsel %vm28, %v17, 0
  %41 = vmatpush.msra.mxu0 0.0
  %42 = vmatpush.msra.mxu0 0.0
  %43 = vmatpush.msra.mxu0 0.0
  %44 = vmatpush.msra.mxu0 0.0
  %45 = vmatpush.msra.mxu0 0.0
  %46 = vmatpush.msra.mxu0 0.0
  %47 = vmatpush.msra.mxu0 0.0
  %48 = vmatpush.msra.mxu0 0.0
  %49 = vmatpush.msra.mxu0 0.0
  %50 = vmatpush.msra.mxu0 0.0
  %51 = vmatpush.msra.mxu0 %v23
  %52 = vmatpush.msra.mxu0 %v22
  %53 = vmatpush.msra.mxu0 %v21
  %54 = vmatpush.msra.mxu0 %v20
  %55 = vmatpush.msra.mxu0 %v19
  %56 = vmatpush.msra.mxu0 %v18
  %57 = vmatmul.f32.gmra.mxu0 %v30
  %v58 = vpop.f32.mrf.mxu0
  %v59 = vadd.f32 %v26, %v58
  %60 = vmatmul.f32.gmra.mxu0 %v33
  %v61 = vpop.f32.mrf.mxu0
  %v62 = vadd.f32 %v26, %v61
  %63 = vmatmul.f32.gmra.mxu0 %v36
  %v64 = vpop.f32.mrf.mxu0
  %v65 = vadd.f32 %v26, %v64
  %66 = vmatmul.f32.gmra.mxu0 %v39
  %v67 = vpop.f32.mrf.mxu0
  %v68 = vadd.f32 %v26, %v67
  %69 = vdwg.mxu0
  %vm70 = vcmask 261120
  %71 = vst.msk [vmem:[%s3] sm:$0xff] %vm70, %v59
  %72 = vst.msk [vmem:[%s3 + $0x8] sm:$0xff] %vm70, %v62
  %73 = vst.msk [vmem:[%s3 + $0x10] sm:$0xff] %vm70, %v65
  %74 = vst.msk [vmem:[%s3 + $0x18] sm:$0xff] %vm70, %v68
  // Predicated region
  $region14: #{_lambda_.3} parent=0 // pred_check
    _
  $region15: #{_lambda_.3} parent=0 // pred_check_branch
    %76 = sbr.rel (0) target = $region17
  $region16: #{_lambda_.3} parent=0 // pred_region
    _
  $region17: #{_lambda_.3} parent=0 // pred_fallthru
    _
  // Predicated region
  $region18: #{_lambda_.3} parent=0 // pred_check
    _
  $region19: #{_lambda_.3} parent=0 // pred_check_branch
    %78 = sbr.rel (0) target = $region21
  $region20: #{_lambda_.3} parent=0 // pred_region
    _
  $region21: #{_lambda_.3} parent=0 // pred_fallthru
    _

// kernel: _lambda_.5
$region0: #{_lambda_.5}
  #allocation0 [shape = 'u32[]', space=smem, size = 0x4, offset = 0x4, fixed_abs, tag = 'smem constant byte address 0x4 - core index']
  #allocation1 [shape = 'u32[72,128]{1,0:T(1,128)}', space=vmem, size = 0x9000, scoped, tag = 'internal scratch']
  %s0 = inlined_call_operand.vmem [shape: f32[2,16,32], index: 0, kind: input, shape index: {}]
  %s1 = inlined_call_operand.vmem [shape: f32[1,32], index: 1, kind: input, shape index: {}]
  %s2 = inlined_call_operand.vmem [shape: f32[1,32], index: 2, kind: input, shape index: {}]
  %s3 = inlined_call_operand.vmem [shape: f32[32,10], index: 3, kind: input, shape index: {}]
  %s4 = inlined_call_operand.vmem [shape: f32[1,10], index: 4, kind: input, shape index: {}]
  %s5 = inlined_call_operand.hbm [shape: f32[2,10], index: 5, kind: output, shape index: {}]
  %s6 = sld [smem:[#allocation0]]
  $region30: #{_lambda_.5} parent=0
    _
  %s8 = ssub.s32 1, %s6
  %s9 = scalar_select 0, %s8, %s6
  $region1: #{_lambda_.5} parent=0
    #allocation2 [shape = 'u8[1024]{0}', space=vmem, size = 0x400, scoped, tag = 'output window, operand 0, single buffered']
    #allocation3 [shape = 's32[1]{0}', space=sflag, size = 0x4, scoped, tag = 'scoped memory for _lambda_.5']
    %10 = vsyncpa [#allocation3], 0
    // Predicated region
    $region2: #{_lambda_.5} parent=1 // pred_check
      _
    $region3: #{_lambda_.5} parent=1 // pred_check_branch
      %12 = sbr.rel (0) target = $region5
    $region4: #{_lambda_.5} parent=1 // pred_region
      _
    $region5: #{_lambda_.5} parent=1 // pred_fallthru
      _
    // Predicated region
    $region6: #{_lambda_.5} parent=1 // pred_check
      _
    $region7: #{_lambda_.5} parent=1 // pred_check_branch
      %14 = sbr.rel (0) target = $region9
    $region8: #{_lambda_.5} parent=1 // pred_region
      _
    $region9: #{_lambda_.5} parent=1 // pred_fallthru
      _
    // Predicated region
    $region10: #{_lambda_.5} parent=1 // pred_check
      _
    $region11: #{_lambda_.5} parent=1 // pred_check_branch
      %16 = sbr.rel (0) target = $region13
    $region12: #{_lambda_.5} parent=1 // pred_region
      _
    $region13: #{_lambda_.5} parent=1 // pred_fallthru
      _
    // Predicated region
    $region14: #{_lambda_.5} parent=1 // pred_check
      _
    $region15: #{_lambda_.5} parent=1 // pred_check_branch
      %18 = sbr.rel (0) target = $region17
    $region16: #{_lambda_.5} parent=1 // pred_region
      _
    $region17: #{_lambda_.5} parent=1 // pred_fallthru
      _
    // Predicated region
    $region18: #{_lambda_.5} parent=1 // pred_check
      _
    $region19: #{_lambda_.5} parent=1 // pred_check_branch
      %20 = sbr.rel (0) target = $region21
    $region20: #{_lambda_.5} parent=1 // pred_region
      _
    $region21: #{_lambda_.5} parent=1 // pred_fallthru
      _
    %v21 = vld [vmem:[%s0] sm:$0xff]
    %v22 = vld [vmem:[%s0 + $0x8] sm:$0xff]
    %v23 = vld [vmem:[%s0 + $0x10] sm:$0xff]
    %v24 = vld [vmem:[%s0 + $0x18] sm:$0xff]
    %v25 = vld [vmem:[%s1] sm:$0x1]
    %v26 = vld [vmem:[%s2] sm:$0x1]
    %vm27 = vcmask 261120
    %v28 = vsel %vm27, %v21, 0.0
    %29 = vadd.xlane.f32.xlu0 %v28
    %v30 = vpop.xlane.xlu0 %29
    %v31 = vsel %vm27, %v22, 0.0
    %32 = vadd.xlane.f32.xlu0 %v31
    %v33 = vpop.xlane.xlu0 %32
    %v34 = vsel %vm27, %v23, 0.0
    %35 = vadd.xlane.f32.xlu0 %v34
    %v36 = vpop.xlane.xlu0 %35
    %v37 = vsel %vm27, %v24, 0.0
    %38 = vadd.xlane.f32.xlu0 %v37
    %v39 = vpop.xlane.xlu0 %38
    %v40 = vrcp.pop 32.0
    %v41 = vmul.f32 32.0, %v40
    %v42 = vsub.f32 1.0, %v41
    %v43 = vmul.f32 %v40, %v42
    %v44 = vadd.f32 %v40, %v43
    %vm45 = vweird.f32 %v40
    %v46 = vsel %vm45, %v40, %v44
    %v47 = vmul.f32 %v30, %v46
    %v48 = vmul.f32 %v33, %v46
    %v49 = vmul.f32 %v36, %v46
    %v50 = vmul.f32 %v39, %v46
    %v51 = vsub.f32 %v21, %v47
    %v52 = vsub.f32 %v22, %v48
    %v53 = vsub.f32 %v23, %v49
    %v54 = vsub.f32 %v24, %v50
    %v55 = vmul.f32 %v51, %v51
    %v56 = vmul.f32 %v52, %v52
    %v57 = vmul.f32 %v53, %v53
    %v58 = vmul.f32 %v54, %v54
    %v59 = vsel %vm27, %v55, 0.0
    %60 = vadd.xlane.f32.xlu0 %v59
    %v61 = vpop.xlane.xlu0 %60
    %v62 = vsel %vm27, %v56, 0.0
    %63 = vadd.xlane.f32.xlu0 %v62
    %v64 = vpop.xlane.xlu0 %63
    %v65 = vsel %vm27, %v57, 0.0
    %66 = vadd.xlane.f32.xlu0 %v65
    %v67 = vpop.xlane.xlu0 %66
    %v68 = vsel %vm27, %v58, 0.0
    %69 = vadd.xlane.f32.xlu0 %v68
    %v70 = vpop.xlane.xlu0 %69
    %v71 = vmul.f32 %v61, %v46
    %v72 = vmul.f32 %v64, %v46
    %v73 = vmul.f32 %v67, %v46
    %v74 = vmul.f32 %v70, %v46
    %v75 = vadd.f32 %v71, 1e-05
    %v76 = vadd.f32 %v72, 1e-05
    %v77 = vadd.f32 %v73, 1e-05
    %v78 = vadd.f32 %v74, 1e-05
    %v79 = vrsqrt.pop %v75
    %v80 = vmul.f32 %v79, %v75
    %v81 = vmul.f32 %v80, %v79
    %v82 = vmul.f32 0.5, %v81
    %v83 = vsub.f32 1.5, %v82
    %v84 = vmul.f32 %v79, %v83
    %vm85 = vweird.f32 %v75
    %vm86 = vweird.f32 %v79
    %vm87 = vmor %vm85, %vm86
    %v88 = vsel %vm87, %v79, %v84
    %v89 = vrsqrt.pop %v76
    %v90 = vmul.f32 %v89, %v76
    %v91 = vmul.f32 %v90, %v89
    %v92 = vmul.f32 0.5, %v91
    %v93 = vsub.f32 1.5, %v92
    %v94 = vmul.f32 %v89, %v93
    %vm95 = vweird.f32 %v76
    %vm96 = vweird.f32 %v89
    %vm97 = vmor %vm95, %vm96
    %v98 = vsel %vm97, %v89, %v94
    %v99 = vrsqrt.pop %v77
    %v100 = vmul.f32 %v99, %v77
    %v101 = vmul.f32 %v100, %v99
    %v102 = vmul.f32 0.5, %v101
    %v103 = vsub.f32 1.5, %v102
    %v104 = vmul.f32 %v99, %v103
    %vm105 = vweird.f32 %v77
    %vm106 = vweird.f32 %v99
    %vm107 = vmor %vm105, %vm106
    %v108 = vsel %vm107, %v99, %v104
    %v109 = vrsqrt.pop %v78
    %v110 = vmul.f32 %v109, %v78
    %v111 = vmul.f32 %v110, %v109
    %v112 = vmul.f32 0.5, %v111
    %v113 = vsub.f32 1.5, %v112
    %v114 = vmul.f32 %v109, %v113
    %vm115 = vweird.f32 %v78
    %vm116 = vweird.f32 %v109
    %vm117 = vmor %vm115, %vm116
    %v118 = vsel %vm117, %v109, %v114
    %v119 = vmul.f32 %v51, %v88
    %v120 = vmul.f32 %v52, %v98
    %v121 = vmul.f32 %v53, %v108
    %v122 = vmul.f32 %v54, %v118
    %v124 = vperm.slane %v25, 0
    %v126 = vmul.f32 %v119, %v124
    %v127 = vmul.f32 %v120, %v124
    %v128 = vmul.f32 %v121, %v124
    %v129 = vmul.f32 %v122, %v124
    %v131 = vperm.slane %v26, 0
    %v133 = vadd.f32 %v126, %v131
    %v134 = vadd.f32 %v127, %v131
    %v135 = vadd.f32 %v128, %v131
    %v136 = vadd.f32 %v129, %v131
    %v137 = vsel %vm27, %v133, 0.0
    %v138 = vsel %vm27, %v134, 0.0
    %v139 = vadd.f32 %v137, %v138
    %v140 = vrot.slane %v139, 4
    %v141 = vadd.f32 %v139, %v140
    %v142 = vrot.slane %v141, 2
    %v143 = vadd.f32 %v141, %v142
    %v144 = vrot.slane %v143, 1
    %v145 = vadd.f32 %v143, %v144
    %v146 = vsel %vm27, %v135, 0.0
    %v147 = vsel %vm27, %v136, 0.0
    %v148 = vadd.f32 %v146, %v147
    %v149 = vrot.slane %v148, 4
    %v150 = vadd.f32 %v148, %v149
    %v151 = vrot.slane %v150, 2
    %v152 = vadd.f32 %v150, %v151
    %v153 = vrot.slane %v152, 1
    %v154 = vadd.f32 %v152, %v153
    %v155 = vrcp.pop 16.0
    %v156 = vmul.f32 16.0, %v155
    %v157 = vsub.f32 1.0, %v156
    %v158 = vmul.f32 %v155, %v157
    %v159 = vadd.f32 %v155, %v158
    %vm160 = vweird.f32 %v155
    %v161 = vsel %vm160, %v155, %v159
    %v162 = vmul.f32 %v145, %v161
    %v163 = vmul.f32 %v154, %v161
    %v164 = vld [vmem:[%s3] sm:$0xff]
    %v165 = vld [vmem:[%s3 + $0x8] sm:$0xff]
    %v166 = vld [vmem:[%s3 + $0x10] sm:$0xff]
    %v167 = vld [vmem:[%s3 + $0x18] sm:$0xff]
    %v168 = vld [vmem:[%s4] sm:$0x1]
    %v170 = vperm.slane %v168, 0
    %vm174 = vcmask 1041409
    %v175 = vsel %vm174, %v163, %v162
    %v176 = vsel %vm27, %v175, 0
    %178 = vmatpush.msra.mxu0 0.0
    %179 = vmatpush.msra.mxu0 0.0
    %180 = vmatpush.msra.mxu0 0.0
    %181 = vmatpush.msra.mxu0 0.0
    %182 = vmatpush.msra.mxu0 0.0
    %183 = vmatpush.msra.mxu0 0.0
    %184 = vmatpush.msra.mxu0 0.0
    %185 = vmatpush.msra.mxu0 0.0
    %186 = vmatpush.msra.mxu0 0.0
    %187 = vmatpush.msra.mxu0 0.0
    %188 = vmatpush.msra.mxu0 0.0
    %189 = vmatpush.msra.mxu0 0.0
    %190 = vmatpush.msra.mxu0 %v167
    %191 = vmatpush.msra.mxu0 %v166
    %192 = vmatpush.msra.mxu0 %v165
    %193 = vmatpush.msra.mxu0 %v164
    %194 = vmatmul.f32.gmra.mxu0 %v176
    %v195 = vpop.f32.mrf.mxu0
    %v196 = vadd.f32 %v170, %v195
    %197 = vdwg.mxu0
    %vm198 = vcmask 74752
    %199 = vst.msk [vmem:[#allocation2] sm:$0x3] %vm198, %v196
    // Predicated region
    $region22: #{_lambda_.5} parent=1 // pred_check
      _
    $region23: #{_lambda_.5} parent=1 // pred_check_branch
      %201 = sbr.rel (0) target = $region25
    $region24: #{_lambda_.5} parent=1 // pred_region
      %203 = vsyncadd [#allocation3], 0
      %s205 = sshll.u32 [#allocation2], 4
      %s206 = int_to_ptr.vmem [resolvable:$true] %s205
      %s207 = sshll.u32 %s5, 4
      %s208 = int_to_ptr.hbm [resolvable:$true] %s207
      %210 = dma.vmem_to_hbm [thread:$0]  %s206, 32, %s208, [#allocation3]
    $region25: #{_lambda_.5} parent=1 // pred_fallthru
      _
    // Predicated region
    $region26: #{_lambda_.5} parent=1 // pred_check
      _
    $region27: #{_lambda_.5} parent=1 // pred_check_branch
      %212 = sbr.rel (0) target = $region29
    $region28: #{_lambda_.5} parent=1 // pred_region
      %214 = dma.done [#allocation3], 32
    $region29: #{_lambda_.5} parent=1 // pred_fallthru
      _
    %215 = vsyncpa [#allocation3], 1

// kernel: _lambda_.4
$region0: #{_lambda_.4}
  #allocation0 [shape = 'u32[]', space=smem, size = 0x4, offset = 0x4, fixed_abs, tag = 'smem constant byte address 0x4 - core index']
  #allocation1 [shape = 'u32[72,128]{1,0:T(1,128)}', space=vmem, size = 0x9000, scoped, tag = 'internal scratch']
  #allocation2 [shape = 'f32[1,16,32]{2,1,0:T(8,128)}', space=vmem, size = 0x2000, scoped, tag = 'scratch operand']
  %s0 = inlined_call_operand.vmem [shape: f32[2,16,32], index: 0, kind: input, shape index: {}]
  %s1 = inlined_call_operand.vmem [shape: f32[2,1,32], index: 1, kind: input, shape index: {}]
  %s2 = inlined_call_operand.vmem [shape: f32[2,1,32], index: 2, kind: input, shape index: {}]
  %s3 = inlined_call_operand.vmem [shape: f32[2,24,16], index: 3, kind: input, shape index: {}]
  %s4 = inlined_call_operand.vmem [shape: f32[2,24,32], index: 4, kind: input, shape index: {}]
  %s5 = inlined_call_operand.vmem [shape: f32[2,16,24], index: 5, kind: input, shape index: {}]
  %s6 = inlined_call_operand.vmem [shape: f32[2,16,32], index: 6, kind: input, shape index: {}]
  %s7 = inlined_call_operand.vmem [shape: f32[2,1,32], index: 7, kind: input, shape index: {}]
  %s8 = inlined_call_operand.vmem [shape: f32[2,1,32], index: 8, kind: input, shape index: {}]
  %s9 = inlined_call_operand.vmem [shape: f32[2,32,64], index: 9, kind: input, shape index: {}]
  %s10 = inlined_call_operand.vmem [shape: f32[2,1,64], index: 10, kind: input, shape index: {}]
  %s11 = inlined_call_operand.vmem [shape: f32[2,64,32], index: 11, kind: input, shape index: {}]
  %s12 = inlined_call_operand.vmem [shape: f32[2,1,32], index: 12, kind: input, shape index: {}]
  %s13 = inlined_call_operand.vmem [shape: f32[2,16,32], index: 13, kind: output, shape index: {}]
  %s14 = sld [smem:[#allocation0]]
  $region93: #{_lambda_.4} parent=0
    _
  %s16 = ssub.s32 1, %s14
  %s17 = scalar_select 0, %s16, %s14
  loop: start=0, step=1, limit=6
  $region2: #{_lambda_.4} parent=0 // loop_pre_header
    _
  $region3: #{_lambda_.4} parent=0 // loop_header
    %s19 = sphi 0, %s23
    %p20 = scmp.ge.s32.totalorder %s19, 6
    %s26 = sphi 0, %s38
    %s27 = sphi 0, %s34
    %s28 = sphi 0, %s26
    %s29 = sphi 0, %s27
    %s30 = sphi 0, %s28
    %s31 = sphi 0, %s29
    %s41 = sphi 0, %s43
    %s44 = sphi 0, %s41
    %s45 = sphi 0, %s44
    %s61 = sphi 0, %s45
    %s67 = sphi 0, %s69
    %s70 = sphi 0, %s67
    %s71 = sphi 0, %s70
    %s87 = sphi 0, %s71
    %s93 = sphi 0, %s95
    %s96 = sphi 0, %s93
    %s97 = sphi 0, %s96
    %s113 = sphi 0, %s97
    %s119 = sphi 0, %s121
    %s122 = sphi 0, %s119
    %s123 = sphi 0, %s122
    %s139 = sphi 0, %s123
    %s145 = sphi 0, %s147
    %s148 = sphi 0, %s145
    %s149 = sphi 0, %s148
    %s165 = sphi 0, %s149
    %s171 = sphi 0, %s173
    %s174 = sphi 0, %s171
    %s175 = sphi 0, %s174
    %s191 = sphi 0, %s175
    %s197 = sphi 0, %s199
    %s200 = sphi 0, %s197
    %s201 = sphi 0, %s200
    %s217 = sphi 0, %s201
    %s223 = sphi 0, %s225
    %s226 = sphi 0, %s223
    %s227 = sphi 0, %s226
    %s243 = sphi 0, %s227
    %s249 = sphi 0, %s251
    %s252 = sphi 0, %s249
    %s253 = sphi 0, %s252
    %s269 = sphi 0, %s253
    %s275 = sphi 0, %s277
    %s278 = sphi 0, %s275
    %s279 = sphi 0, %s278
    %s295 = sphi 0, %s279
    %s301 = sphi 0, %s303
    %s304 = sphi 0, %s301
    %s305 = sphi 0, %s304
    %s321 = sphi 0, %s305
    %s327 = sphi 0, %s329
    %s330 = sphi 0, %s327
    %s331 = sphi 0, %s330
    %s347 = sphi 0, %s331
    %s353 = sphi 0, %s355
    %s356 = sphi 0, %s353
    %s357 = sphi 0, %s356
    %s373 = sphi 0, %s357
    %s379 = sphi 0, %s381
    %s382 = sphi 0, %s379
    %s383 = sphi 0, %s382
    %s399 = sphi 0, %s383
  $region4: #{_lambda_.4} parent=0 // loop_header_branch
    %22 = sbr.rel (%p20) target = $region8
  $region5: #{_lambda_.4} parent=0 // loop_body
    %s24 = ssub.s32 %s19, 1
    %s25 = ssub.s32 %s19, 2
    %s32 = sadd.s32 1, %s27
    %p33 = scmp.ge.s32.totalorder %s32, 2
    %s34 = scalar_select %p33, 0, %s32
    %s35 = sadd.s32 1, %s26
    %s36 = scalar_select %p33, %s35, %s26
    %p37 = scmp.ge.s32.totalorder %s36, 2
    %s38 = scalar_select %p37, 0, %s36
    %s39 = ssub.s32 %s26, %s38
    %p40 = scmp.eq.s32.totalorder %s39, 0
    %s42 = sadd.s32 %s41, 1
    %s43 = scalar_select %p40, %s41, %s42
    %p46 = pneg %p40
    %p47 = scmp.eq.s32.totalorder %s19, 3
    %p48 = por %p46, %p47
    %p49 = scmp.ne.s32.totalorder %s41, %s44
    %p50 = scmp.eq.s32.totalorder %s19, 0
    %p51 = por %p49, %p50
    %p52 = scmp.ne.s32.totalorder %s41, %s44
    %p53 = scmp.eq.s32.totalorder %s24, 3
    %p54 = por %p52, %p53
    %p55 = scmp.ne.s32.totalorder %s44, %s45
    %p56 = scmp.eq.s32.totalorder %s24, 0
    %p57 = por %p55, %p56
    %p58 = scmp.ne.s32.totalorder %s44, %s45
    %p59 = scmp.eq.s32.totalorder %s25, 3
    %p60 = por %p58, %p59
    %p62 = scmp.ne.s32.totalorder %s45, %s61
    %p63 = scmp.eq.s32.totalorder %s25, 0
    %p64 = por %p62, %p63
    %s65 = ssub.s32 %s27, %s34
    %p66 = scmp.eq.s32.totalorder %s65, 0
    %s68 = sadd.s32 %s67, 1
    %s69 = scalar_select %p66, %s67, %s68
    %p72 = pneg %p66
    %p73 = scmp.eq.s32.totalorder %s19, 3
    %p74 = por %p72, %p73
    %p75 = scmp.ne.s32.totalorder %s67, %s70
    %p76 = scmp.eq.s32.totalorder %s19, 0
    %p77 = por %p75, %p76
    %p78 = scmp.ne.s32.totalorder %s67, %s70
    %p79 = scmp.eq.s32.totalorder %s24, 3
    %p80 = por %p78, %p79
    %p81 = scmp.ne.s32.totalorder %s70, %s71
    %p82 = scmp.eq.s32.totalorder %s24, 0
    %p83 = por %p81, %p82
    %p84 = scmp.ne.s32.totalorder %s70, %s71
    %p85 = scmp.eq.s32.totalorder %s25, 3
    %p86 = por %p84, %p85
    %p88 = scmp.ne.s32.totalorder %s71, %s87
    %p89 = scmp.eq.s32.totalorder %s25, 0
    %p90 = por %p88, %p89
    %s91 = ssub.s32 %s27, %s34
    %p92 = scmp.eq.s32.totalorder %s91, 0
    %s94 = sadd.s32 %s93, 1
    %s95 = scalar_select %p92, %s93, %s94
    %p98 = pneg %p92
    %p99 = scmp.eq.s32.totalorder %s19, 3
    %p100 = por %p98, %p99
    %p101 = scmp.ne.s32.totalorder %s93, %s96
    %p102 = scmp.eq.s32.totalorder %s19, 0
    %p103 = por %p101, %p102
    %p104 = scmp.ne.s32.totalorder %s93, %s96
    %p105 = scmp.eq.s32.totalorder %s24, 3
    %p106 = por %p104, %p105
    %p107 = scmp.ne.s32.totalorder %s96, %s97
    %p108 = scmp.eq.s32.totalorder %s24, 0
    %p109 = por %p107, %p108
    %p110 = scmp.ne.s32.totalorder %s96, %s97
    %p111 = scmp.eq.s32.totalorder %s25, 3
    %p112 = por %p110, %p111
    %p114 = scmp.ne.s32.totalorder %s97, %s113
    %p115 = scmp.eq.s32.totalorder %s25, 0
    %p116 = por %p114, %p115
    %s117 = ssub.s32 %s27, %s34
    %p118 = scmp.eq.s32.totalorder %s117, 0
    %s120 = sadd.s32 %s119, 1
    %s121 = scalar_select %p118, %s119, %s120
    %p124 = pneg %p118
    %p125 = scmp.eq.s32.totalorder %s19, 3
    %p126 = por %p124, %p125
    %p127 = scmp.ne.s32.totalorder %s119, %s122
    %p128 = scmp.eq.s32.totalorder %s19, 0
    %p129 = por %p127, %p128
    %p130 = scmp.ne.s32.totalorder %s119, %s122
    %p131 = scmp.eq.s32.totalorder %s24, 3
    %p132 = por %p130, %p131
    %p133 = scmp.ne.s32.totalorder %s122, %s123
    %p134 = scmp.eq.s32.totalorder %s24, 0
    %p135 = por %p133, %p134
    %p136 = scmp.ne.s32.totalorder %s122, %s123
    %p137 = scmp.eq.s32.totalorder %s25, 3
    %p138 = por %p136, %p137
    %p140 = scmp.ne.s32.totalorder %s123, %s139
    %p141 = scmp.eq.s32.totalorder %s25, 0
    %p142 = por %p140, %p141
    %s143 = ssub.s32 %s27, %s34
    %p144 = scmp.eq.s32.totalorder %s143, 0
    %s146 = sadd.s32 %s145, 1
    %s147 = scalar_select %p144, %s145, %s146
    %p150 = pneg %p144
    %p151 = scmp.eq.s32.totalorder %s19, 3
    %p152 = por %p150, %p151
    %p153 = scmp.ne.s32.totalorder %s145, %s148
    %p154 = scmp.eq.s32.totalorder %s19, 0
    %p155 = por %p153, %p154
    %p156 = scmp.ne.s32.totalorder %s145, %s148
    %p157 = scmp.eq.s32.totalorder %s24, 3
    %p158 = por %p156, %p157
    %p159 = scmp.ne.s32.totalorder %s148, %s149
    %p160 = scmp.eq.s32.totalorder %s24, 0
    %p161 = por %p159, %p160
    %p162 = scmp.ne.s32.totalorder %s148, %s149
    %p163 = scmp.eq.s32.totalorder %s25, 3
    %p164 = por %p162, %p163
    %p166 = scmp.ne.s32.totalorder %s149, %s165
    %p167 = scmp.eq.s32.totalorder %s25, 0
    %p168 = por %p166, %p167
    %s169 = ssub.s32 %s27, %s34
    %p170 = scmp.eq.s32.totalorder %s169, 0
    %s172 = sadd.s32 %s171, 1
    %s173 = scalar_select %p170, %s171, %s172
    %p176 = pneg %p170
    %p177 = scmp.eq.s32.totalorder %s19, 3
    %p178 = por %p176, %p177
    %p179 = scmp.ne.s32.totalorder %s171, %s174
    %p180 = scmp.eq.s32.totalorder %s19, 0
    %p181 = por %p179, %p180
    %p182 = scmp.ne.s32.totalorder %s171, %s174
    %p183 = scmp.eq.s32.totalorder %s24, 3
    %p184 = por %p182, %p183
    %p185 = scmp.ne.s32.totalorder %s174, %s175
    %p186 = scmp.eq.s32.totalorder %s24, 0
    %p187 = por %p185, %p186
    %p188 = scmp.ne.s32.totalorder %s174, %s175
    %p189 = scmp.eq.s32.totalorder %s25, 3
    %p190 = por %p188, %p189
    %p192 = scmp.ne.s32.totalorder %s175, %s191
    %p193 = scmp.eq.s32.totalorder %s25, 0
    %p194 = por %p192, %p193
    %s195 = ssub.s32 %s27, %s34
    %p196 = scmp.eq.s32.totalorder %s195, 0
    %s198 = sadd.s32 %s197, 1
    %s199 = scalar_select %p196, %s197, %s198
    %p202 = pneg %p196
    %p203 = scmp.eq.s32.totalorder %s19, 3
    %p204 = por %p202, %p203
    %p205 = scmp.ne.s32.totalorder %s197, %s200
    %p206 = scmp.eq.s32.totalorder %s19, 0
    %p207 = por %p205, %p206
    %p208 = scmp.ne.s32.totalorder %s197, %s200
    %p209 = scmp.eq.s32.totalorder %s24, 3
    %p210 = por %p208, %p209
    %p211 = scmp.ne.s32.totalorder %s200, %s201
    %p212 = scmp.eq.s32.totalorder %s24, 0
    %p213 = por %p211, %p212
    %p214 = scmp.ne.s32.totalorder %s200, %s201
    %p215 = scmp.eq.s32.totalorder %s25, 3
    %p216 = por %p214, %p215
    %p218 = scmp.ne.s32.totalorder %s201, %s217
    %p219 = scmp.eq.s32.totalorder %s25, 0
    %p220 = por %p218, %p219
    %s221 = ssub.s32 %s27, %s34
    %p222 = scmp.eq.s32.totalorder %s221, 0
    %s224 = sadd.s32 %s223, 1
    %s225 = scalar_select %p222, %s223, %s224
    %p228 = pneg %p222
    %p229 = scmp.eq.s32.totalorder %s19, 3
    %p230 = por %p228, %p229
    %p231 = scmp.ne.s32.totalorder %s223, %s226
    %p232 = scmp.eq.s32.totalorder %s19, 0
    %p233 = por %p231, %p232
    %p234 = scmp.ne.s32.totalorder %s223, %s226
    %p235 = scmp.eq.s32.totalorder %s24, 3
    %p236 = por %p234, %p235
    %p237 = scmp.ne.s32.totalorder %s226, %s227
    %p238 = scmp.eq.s32.totalorder %s24, 0
    %p239 = por %p237, %p238
    %p240 = scmp.ne.s32.totalorder %s226, %s227
    %p241 = scmp.eq.s32.totalorder %s25, 3
    %p242 = por %p240, %p241
    %p244 = scmp.ne.s32.totalorder %s227, %s243
    %p245 = scmp.eq.s32.totalorder %s25, 0
    %p246 = por %p244, %p245
    %s247 = ssub.s32 %s27, %s34
    %p248 = scmp.eq.s32.totalorder %s247, 0
    %s250 = sadd.s32 %s249, 1
    %s251 = scalar_select %p248, %s249, %s250
    %p254 = pneg %p248
    %p255 = scmp.eq.s32.totalorder %s19, 3
    %p256 = por %p254, %p255
    %p257 = scmp.ne.s32.totalorder %s249, %s252
    %p258 = scmp.eq.s32.totalorder %s19, 0
    %p259 = por %p257, %p258
    %p260 = scmp.ne.s32.totalorder %s249, %s252
    %p261 = scmp.eq.s32.totalorder %s24, 3
    %p262 = por %p260, %p261
    %p263 = scmp.ne.s32.totalorder %s252, %s253
    %p264 = scmp.eq.s32.totalorder %s24, 0
    %p265 = por %p263, %p264
    %p266 = scmp.ne.s32.totalorder %s252, %s253
    %p267 = scmp.eq.s32.totalorder %s25, 3
    %p268 = por %p266, %p267
    %p270 = scmp.ne.s32.totalorder %s253, %s269
    %p271 = scmp.eq.s32.totalorder %s25, 0
    %p272 = por %p270, %p271
    %s273 = ssub.s32 %s27, %s34
    %p274 = scmp.eq.s32.totalorder %s273, 0
    %s276 = sadd.s32 %s275, 1
    %s277 = scalar_select %p274, %s275, %s276
    %p280 = pneg %p274
    %p281 = scmp.eq.s32.totalorder %s19, 3
    %p282 = por %p280, %p281
    %p283 = scmp.ne.s32.totalorder %s275, %s278
    %p284 = scmp.eq.s32.totalorder %s19, 0
    %p285 = por %p283, %p284
    %p286 = scmp.ne.s32.totalorder %s275, %s278
    %p287 = scmp.eq.s32.totalorder %s24, 3
    %p288 = por %p286, %p287
    %p289 = scmp.ne.s32.totalorder %s278, %s279
    %p290 = scmp.eq.s32.totalorder %s24, 0
    %p291 = por %p289, %p290
    %p292 = scmp.ne.s32.totalorder %s278, %s279
    %p293 = scmp.eq.s32.totalorder %s25, 3
    %p294 = por %p292, %p293
    %p296 = scmp.ne.s32.totalorder %s279, %s295
    %p297 = scmp.eq.s32.totalorder %s25, 0
    %p298 = por %p296, %p297
    %s299 = ssub.s32 %s27, %s34
    %p300 = scmp.eq.s32.totalorder %s299, 0
    %s302 = sadd.s32 %s301, 1
    %s303 = scalar_select %p300, %s301, %s302
    %p306 = pneg %p300
    %p307 = scmp.eq.s32.totalorder %s19, 3
    %p308 = por %p306, %p307
    %p309 = scmp.ne.s32.totalorder %s301, %s304
    %p310 = scmp.eq.s32.totalorder %s19, 0
    %p311 = por %p309, %p310
    %p312 = scmp.ne.s32.totalorder %s301, %s304
    %p313 = scmp.eq.s32.totalorder %s24, 3
    %p314 = por %p312, %p313
    %p315 = scmp.ne.s32.totalorder %s304, %s305
    %p316 = scmp.eq.s32.totalorder %s24, 0
    %p317 = por %p315, %p316
    %p318 = scmp.ne.s32.totalorder %s304, %s305
    %p319 = scmp.eq.s32.totalorder %s25, 3
    %p320 = por %p318, %p319
    %p322 = scmp.ne.s32.totalorder %s305, %s321
    %p323 = scmp.eq.s32.totalorder %s25, 0
    %p324 = por %p322, %p323
    %s325 = ssub.s32 %s27, %s34
    %p326 = scmp.eq.s32.totalorder %s325, 0
    %s328 = sadd.s32 %s327, 1
    %s329 = scalar_select %p326, %s327, %s328
    %p332 = pneg %p326
    %p333 = scmp.eq.s32.totalorder %s19, 3
    %p334 = por %p332, %p333
    %p335 = scmp.ne.s32.totalorder %s327, %s330
    %p336 = scmp.eq.s32.totalorder %s19, 0
    %p337 = por %p335, %p336
    %p338 = scmp.ne.s32.totalorder %s327, %s330
    %p339 = scmp.eq.s32.totalorder %s24, 3
    %p340 = por %p338, %p339
    %p341 = scmp.ne.s32.totalorder %s330, %s331
    %p342 = scmp.eq.s32.totalorder %s24, 0
    %p343 = por %p341, %p342
    %p344 = scmp.ne.s32.totalorder %s330, %s331
    %p345 = scmp.eq.s32.totalorder %s25, 3
    %p346 = por %p344, %p345
    %p348 = scmp.ne.s32.totalorder %s331, %s347
    %p349 = scmp.eq.s32.totalorder %s25, 0
    %p350 = por %p348, %p349
    %s351 = ssub.s32 %s27, %s34
    %p352 = scmp.eq.s32.totalorder %s351, 0
    %s354 = sadd.s32 %s353, 1
    %s355 = scalar_select %p352, %s353, %s354
    %p358 = pneg %p352
    %p359 = scmp.eq.s32.totalorder %s19, 3
    %p360 = por %p358, %p359
    %p361 = scmp.ne.s32.totalorder %s353, %s356
    %p362 = scmp.eq.s32.totalorder %s19, 0
    %p363 = por %p361, %p362
    %p364 = scmp.ne.s32.totalorder %s353, %s356
    %p365 = scmp.eq.s32.totalorder %s24, 3
    %p366 = por %p364, %p365
    %p367 = scmp.ne.s32.totalorder %s356, %s357
    %p368 = scmp.eq.s32.totalorder %s24, 0
    %p369 = por %p367, %p368
    %p370 = scmp.ne.s32.totalorder %s356, %s357
    %p371 = scmp.eq.s32.totalorder %s25, 3
    %p372 = por %p370, %p371
    %p374 = scmp.ne.s32.totalorder %s357, %s373
    %p375 = scmp.eq.s32.totalorder %s25, 0
    %p376 = por %p374, %p375
    %s377 = ssub.s32 %s26, %s38
    %p378 = scmp.eq.s32.totalorder %s377, 0
    %s380 = sadd.s32 %s379, 1
    %s381 = scalar_select %p378, %s379, %s380
    %p384 = pneg %p378
    %p385 = scmp.eq.s32.totalorder %s19, 3
    %p386 = por %p384, %p385
    %p387 = scmp.ne.s32.totalorder %s379, %s382
    %p388 = scmp.eq.s32.totalorder %s19, 0
    %p389 = por %p387, %p388
    %p390 = scmp.ne.s32.totalorder %s379, %s382
    %p391 = scmp.eq.s32.totalorder %s24, 3
    %p392 = por %p390, %p391
    %p393 = scmp.ne.s32.totalorder %s382, %s383
    %p394 = scmp.eq.s32.totalorder %s24, 0
    %p395 = por %p393, %p394
    %p396 = scmp.ne.s32.totalorder %s382, %s383
    %p397 = scmp.eq.s32.totalorder %s25, 3
    %p398 = por %p396, %p397
    %p400 = scmp.ne.s32.totalorder %s383, %s399
    %p401 = scmp.eq.s32.totalorder %s25, 0
    %p402 = por %p400, %p401
    %p403 = scmp.le.s32.totalorder 1, %s19
    %p404 = scmp.lt.s32.totalorder %s19, 5
    %p405 = pnand %p403, %p404
    %p406 = pneg %p405
    // Predicated region
    $region9: #{_lambda_.4} parent=5 // pred_check
      _
    $region10: #{_lambda_.4} parent=5 // pred_check_branch
      %408 = sbr.rel (%p405) target = $region12
    $region11: #{_lambda_.4} parent=5 // pred_region
      %s409 = ssub.s32 %s19, 1
    $region12: #{_lambda_.4} parent=5 // pred_fallthru
      _
    %p410 = scmp.lt.s32.totalorder %s19, 4
    // Predicated region
    $region13: #{_lambda_.4} parent=5 // pred_check
      %p411 = pneg %p410
    $region14: #{_lambda_.4} parent=5 // pred_check_branch
      %413 = sbr.rel (%p411) target = $region16
    $region15: #{_lambda_.4} parent=5 // pred_region
      // Predicated region
      $region17: #{_lambda_.4} parent=15 // pred_check
        %p414 = pneg %p51
      $region18: #{_lambda_.4} parent=15 // pred_check_branch
        %416 = sbr.rel (%p414) target = $region20
      $region19: #{_lambda_.4} parent=15 // pred_region
        %p417 = scmp.lt.s32.totalorder %s26, 1
        %s418 = scalar_select %p417, %s26, 1
        %s419 = smul.addr %s418, 2
        %s420 = smul.addr %s419, 8
        %s421 = scalar_lea.vmem %s0, %s420
      $region20: #{_lambda_.4} parent=15 // pred_fallthru
        _
      // Predicated region
      $region21: #{_lambda_.4} parent=15 // pred_check
        %p422 = pneg %p77
      $region22: #{_lambda_.4} parent=15 // pred_check_branch
        %424 = sbr.rel (%p422) target = $region24
      $region23: #{_lambda_.4} parent=15 // pred_region
        %p425 = scmp.lt.s32.totalorder %s27, 1
        %s426 = scalar_select %p425, %s27, 1
        %s427 = scalar_lea.vmem %s1, %s426
      $region24: #{_lambda_.4} parent=15 // pred_fallthru
        _
      // Predicated region
      $region25: #{_lambda_.4} parent=15 // pred_check
        %p428 = pneg %p103
      $region26: #{_lambda_.4} parent=15 // pred_check_branch
        %430 = sbr.rel (%p428) target = $region28
      $region27: #{_lambda_.4} parent=15 // pred_region
        %p431 = scmp.lt.s32.totalorder %s27, 1
        %s432 = scalar_select %p431, %s27, 1
        %s433 = scalar_lea.vmem %s2, %s432
      $region28: #{_lambda_.4} parent=15 // pred_fallthru
        _
      // Predicated region
      $region29: #{_lambda_.4} parent=15 // pred_check
        %p434 = pneg %p129
      $region30: #{_lambda_.4} parent=15 // pred_check_branch
        %436 = sbr.rel (%p434) target = $region32
      $region31: #{_lambda_.4} parent=15 // pred_region
        %p437 = scmp.lt.s32.totalorder %s27, 1
        %s438 = scalar_select %p437, %s27, 1
        %s439 = smul.addr %s438, 3
        %s440 = smul.addr %s439, 8
        %s441 = scalar_lea.vmem %s3, %s440
      $region32: #{_lambda_.4} parent=15 // pred_fallthru
        _
      // Predicated region
      $region33: #{_lambda_.4} parent=15 // pred_check
        %p442 = pneg %p155
      $region34: #{_lambda_.4} parent=15 // pred_check_branch
        %444 = sbr.rel (%p442) target = $region36
      $region35: #{_lambda_.4} parent=15 // pred_region
        %p445 = scmp.lt.s32.totalorder %s27, 1
        %s446 = scalar_select %p445, %s27, 1
        %s447 = smul.addr %s446, 3
        %s448 = smul.addr %s447, 8
        %s449 = scalar_lea.vmem %s4, %s448
      $region36: #{_lambda_.4} parent=15 // pred_fallthru
        _
      // Predicated region
      $region37: #{_lambda_.4} parent=15 // pred_check
        %p450 = pneg %p181
      $region38: #{_lambda_.4} parent=15 // pred_check_branch
        %452 = sbr.rel (%p450) target = $region40
      $region39: #{_lambda_.4} parent=15 // pred_region
        %p453 = scmp.lt.s32.totalorder %s27, 1
        %s454 = scalar_select %p453, %s27, 1
        %s455 = smul.addr %s454, 2
        %s456 = smul.addr %s455, 8
        %s457 = scalar_lea.vmem %s5, %s456
      $region40: #{_lambda_.4} parent=15 // pred_fallthru
        _
      // Predicated region
      $region41: #{_lambda_.4} parent=15 // pred_check
        %p458 = pneg %p207
      $region42: #{_lambda_.4} parent=15 // pred_check_branch
        %460 = sbr.rel (%p458) target = $region44
      $region43: #{_lambda_.4} parent=15 // pred_region
        %p461 = scmp.lt.s32.totalorder %s27, 1
        %s462 = scalar_select %p461, %s27, 1
        %s463 = smul.addr %s462, 2
        %s464 = smul.addr %s463, 8
        %s465 = scalar_lea.vmem %s6, %s464
      $region44: #{_lambda_.4} parent=15 // pred_fallthru
        _
      // Predicated region
      $region45: #{_lambda_.4} parent=15 // pred_check
        %p466 = pneg %p233
      $region46: #{_lambda_.4} parent=15 // pred_check_branch
        %468 = sbr.rel (%p466) target = $region48
      $region47: #{_lambda_.4} parent=15 // pred_region
        %p469 = scmp.lt.s32.totalorder %s27, 1
        %s470 = scalar_select %p469, %s27, 1
        %s471 = scalar_lea.vmem %s7, %s470
      $region48: #{_lambda_.4} parent=15 // pred_fallthru
        _
      // Predicated region
      $region49: #{_lambda_.4} parent=15 // pred_check
        %p472 = pneg %p259
      $region50: #{_lambda_.4} parent=15 // pred_check_branch
        %474 = sbr.rel (%p472) target = $region52
      $region51: #{_lambda_.4} parent=15 // pred_region
        %p475 = scmp.lt.s32.totalorder %s27, 1
        %s476 = scalar_select %p475, %s27, 1
        %s477 = scalar_lea.vmem %s8, %s476
      $region52: #{_lambda_.4} parent=15 // pred_fallthru
        _
      // Predicated region
      $region53: #{_lambda_.4} parent=15 // pred_check
        %p478 = pneg %p285
      $region54: #{_lambda_.4} parent=15 // pred_check_branch
        %480 = sbr.rel (%p478) target = $region56
      $region55: #{_lambda_.4} parent=15 // pred_region
        %p481 = scmp.lt.s32.totalorder %s27, 1
        %s482 = scalar_select %p481, %s27, 1
        %s483 = smul.addr %s482, 4
        %s484 = smul.addr %s483, 8
        %s485 = scalar_lea.vmem %s9, %s484
      $region56: #{_lambda_.4} parent=15 // pred_fallthru
        _
      // Predicated region
      $region57: #{_lambda_.4} parent=15 // pred_check
        %p486 = pneg %p311
      $region58: #{_lambda_.4} parent=15 // pred_check_branch
        %488 = sbr.rel (%p486) target = $region60
      $region59: #{_lambda_.4} parent=15 // pred_region
        %p489 = scmp.lt.s32.totalorder %s27, 1
        %s490 = scalar_select %p489, %s27, 1
        %s491 = scalar_lea.vmem %s10, %s490
      $region60: #{_lambda_.4} parent=15 // pred_fallthru
        _
      // Predicated region
      $region61: #{_lambda_.4} parent=15 // pred_check
        %p492 = pneg %p337
      $region62: #{_lambda_.4} parent=15 // pred_check_branch
        %494 = sbr.rel (%p492) target = $region64
      $region63: #{_lambda_.4} parent=15 // pred_region
        %p495 = scmp.lt.s32.totalorder %s27, 1
        %s496 = scalar_select %p495, %s27, 1
        %s497 = smul.addr %s496, 8
        %s498 = smul.addr %s497, 8
        %s499 = scalar_lea.vmem %s11, %s498
      $region64: #{_lambda_.4} parent=15 // pred_fallthru
        _
      // Predicated region
      $region65: #{_lambda_.4} parent=15 // pred_check
        %p500 = pneg %p363
      $region66: #{_lambda_.4} parent=15 // pred_check_branch
        %502 = sbr.rel (%p500) target = $region68
      $region67: #{_lambda_.4} parent=15 // pred_region
        %p503 = scmp.lt.s32.totalorder %s27, 1
        %s504 = scalar_select %p503, %s27, 1
        %s505 = scalar_lea.vmem %s12, %s504
      $region68: #{_lambda_.4} parent=15 // pred_fallthru
        _
    $region16: #{_lambda_.4} parent=5 // pred_fallthru
      _
    %p506 = scmp.le.s32.totalorder 1, %s19
    %p507 = scmp.lt.s32.totalorder %s19, 5
    %p508 = pnand %p506, %p507
    %p509 = pneg %p508
    // Predicated region
    $region69: #{_lambda_.4} parent=5 // pred_check
      _
    $region70: #{_lambda_.4} parent=5 // pred_check_branch
      %511 = sbr.rel (%p508) target = $region72
    $region71: #{_lambda_.4} parent=5 // pred_region
      %s512 = ssub.s32 %s19, 1
      %p513 = scmp.lt.s32.totalorder %s28, 1
      %s514 = scalar_select %p513, %s28, 1
      %s515 = smul.addr %s514, 2
      %s516 = smul.addr %s515, 8
      %s517 = scalar_lea.vmem %s0, %s516
      %p518 = pneg %p57
      %p519 = pneg %p54
      %p520 = scmp.lt.s32.totalorder %s29, 1
      %s521 = scalar_select %p520, %s29, 1
      %s522 = scalar_lea.vmem %s1, %s521
      %p523 = pneg %p83
      %p524 = pneg %p80
      %p525 = scmp.lt.s32.totalorder %s29, 1
      %s526 = scalar_select %p525, %s29, 1
      %s527 = scalar_lea.vmem %s2, %s526
      %p528 = pneg %p109
      %p529 = pneg %p106
      %p530 = scmp.lt.s32.totalorder %s29, 1
      %s531 = scalar_select %p530, %s29, 1
      %s532 = smul.addr %s531, 3
      %s533 = smul.addr %s532, 8
      %s534 = scalar_lea.vmem %s3, %s533
      %p535 = pneg %p135
      %p536 = pneg %p132
      %p537 = scmp.lt.s32.totalorder %s29, 1
      %s538 = scalar_select %p537, %s29, 1
      %s539 = smul.addr %s538, 3
      %s540 = smul.addr %s539, 8
      %s541 = scalar_lea.vmem %s4, %s540
      %p542 = pneg %p161
      %p543 = pneg %p158
      %p544 = scmp.lt.s32.totalorder %s29, 1
      %s545 = scalar_select %p544, %s29, 1
      %s546 = smul.addr %s545, 2
      %s547 = smul.addr %s546, 8
      %s548 = scalar_lea.vmem %s5, %s547
      %p549 = pneg %p187
      %p550 = pneg %p184
      %p551 = scmp.lt.s32.totalorder %s29, 1
      %s552 = scalar_select %p551, %s29, 1
      %s553 = smul.addr %s552, 2
      %s554 = smul.addr %s553, 8
      %s555 = scalar_lea.vmem %s6, %s554
      %p556 = pneg %p213
      %p557 = pneg %p210
      %p558 = scmp.lt.s32.totalorder %s29, 1
      %s559 = scalar_select %p558, %s29, 1
      %s560 = scalar_lea.vmem %s7, %s559
      %p561 = pneg %p239
      %p562 = pneg %p236
      %p563 = scmp.lt.s32.totalorder %s29, 1
      %s564 = scalar_select %p563, %s29, 1
      %s565 = scalar_lea.vmem %s8, %s564
      %p566 = pneg %p265
      %p567 = pneg %p262
      %p568 = scmp.lt.s32.totalorder %s29, 1
      %s569 = scalar_select %p568, %s29, 1
      %s570 = smul.addr %s569, 4
      %s571 = smul.addr %s570, 8
      %s572 = scalar_lea.vmem %s9, %s571
      %p573 = pneg %p291
      %p574 = pneg %p288
      %p575 = scmp.lt.s32.totalorder %s29, 1
      %s576 = scalar_select %p575, %s29, 1
      %s577 = scalar_lea.vmem %s10, %s576
      %p578 = pneg %p317
      %p579 = pneg %p314
      %p580 = scmp.lt.s32.totalorder %s29, 1
      %s581 = scalar_select %p580, %s29, 1
      %s582 = smul.addr %s581, 8
      %s583 = smul.addr %s582, 8
      %s584 = scalar_lea.vmem %s11, %s583
      %p585 = pneg %p343
      %p586 = pneg %p340
      %p587 = scmp.lt.s32.totalorder %s29, 1
      %s588 = scalar_select %p587, %s29, 1
      %s589 = scalar_lea.vmem %s12, %s588
      %p590 = pneg %p369
      %p591 = pneg %p366
      %p592 = pneg %p395
      %p593 = pneg %p392
      %p594 = scmp.lt.s32.totalorder %s28, 1
      %s595 = scalar_select %p594, %s28, 1
      %s596 = smul.addr %s595, 2
      %s597 = smul.addr %s596, 8
      %s598 = scalar_lea.vmem %s13, %s597
      %p599 = scmp.lt.s32.totalorder %s28, 1
      %s600 = scalar_select %p599, %s28, 1
      %s601 = smul.addr %s600, 2
      %s602 = smul.addr %s601, 8
      %s603 = scalar_lea.vmem %s0, %s602
      %p604 = scmp.lt.s32.totalorder %s29, 1
      %s605 = scalar_select %p604, %s29, 1
      %s606 = scalar_lea.vmem %s1, %s605
      %p607 = scmp.lt.s32.totalorder %s29, 1
      %s608 = scalar_select %p607, %s29, 1
      %s609 = scalar_lea.vmem %s2, %s608
      %p610 = scmp.lt.s32.totalorder %s29, 1
      %s611 = scalar_select %p610, %s29, 1
      %s612 = smul.addr %s611, 3
      %s613 = smul.addr %s612, 8
      %s614 = scalar_lea.vmem %s3, %s613
      %p615 = scmp.lt.s32.totalorder %s29, 1
      %s616 = scalar_select %p615, %s29, 1
      %s617 = smul.addr %s616, 3
      %s618 = smul.addr %s617, 8
      %s619 = scalar_lea.vmem %s4, %s618
      %p620 = scmp.lt.s32.totalorder %s29, 1
      %s621 = scalar_select %p620, %s29, 1
      %s622 = smul.addr %s621, 2
      %s623 = smul.addr %s622, 8
      %s624 = scalar_lea.vmem %s5, %s623
      %p625 = scmp.lt.s32.totalorder %s29, 1
      %s626 = scalar_select %p625, %s29, 1
      %s627 = smul.addr %s626, 2
      %s628 = smul.addr %s627, 8
      %s629 = scalar_lea.vmem %s6, %s628
      %p630 = scmp.lt.s32.totalorder %s29, 1
      %s631 = scalar_select %p630, %s29, 1
      %s632 = scalar_lea.vmem %s7, %s631
      %p633 = scmp.lt.s32.totalorder %s29, 1
      %s634 = scalar_select %p633, %s29, 1
      %s635 = scalar_lea.vmem %s8, %s634
      %p636 = scmp.lt.s32.totalorder %s29, 1
      %s637 = scalar_select %p636, %s29, 1
      %s638 = smul.addr %s637, 4
      %s639 = smul.addr %s638, 8
      %s640 = scalar_lea.vmem %s9, %s639
      %p641 = scmp.lt.s32.totalorder %s29, 1
      %s642 = scalar_select %p641, %s29, 1
      %s643 = scalar_lea.vmem %s10, %s642
      %p644 = scmp.lt.s32.totalorder %s29, 1
      %s645 = scalar_select %p644, %s29, 1
      %s646 = smul.addr %s645, 8
      %s647 = smul.addr %s646, 8
      %s648 = scalar_lea.vmem %s11, %s647
      %p649 = scmp.lt.s32.totalorder %s29, 1
      %s650 = scalar_select %p649, %s29, 1
      %s651 = scalar_lea.vmem %s12, %s650
      %p652 = scmp.lt.s32.totalorder %s28, 1
      %s653 = scalar_select %p652, %s28, 1
      %s654 = smul.addr %s653, 2
      %s655 = smul.addr %s654, 8
      %s656 = scalar_lea.vmem %s13, %s655
      %p657 = scmp.eq.s32.totalorder %s29, 0
      // Predicated region
      $region73: #{_lambda_.4} parent=71 // pred_check
        %p658 = pneg %p657
      $region74: #{_lambda_.4} parent=71 // pred_check_branch
        %660 = sbr.rel (%p658) target = $region76
      $region75: #{_lambda_.4} parent=71 // pred_region
        %v661 = vld [vmem:[%s603] sm:$0xff]
        %v662 = vld [vmem:[%s603 + $0x8] sm:$0xff]
        %vm663 = vcmask 261120
        %664 = vst.msk [vmem:[#allocation2] sm:$0xff] %vm663, %v661
        %665 = vst.msk [vmem:[#allocation2 + $0x8] sm:$0xff] %vm663, %v662
      $region76: #{_lambda_.4} parent=71 // pred_fallthru
        _
      %v666 = vld [vmem:[#allocation2] sm:$0xff]
      %v667 = vld [vmem:[#allocation2 + $0x8] sm:$0xff]
      %v668 = vld [vmem:[%s606] sm:$0x1]
      %v669 = vld [vmem:[%s609] sm:$0x1]
      %vm670 = vcmask 261120
      %v671 = vsel %vm670, %v666, 0.0
      %672 = vadd.xlane.f32.xlu0 %v671
      %v673 = vpop.xlane.xlu0 %672
      %v674 = vsel %vm670, %v667, 0.0
      %675 = vadd.xlane.f32.xlu0 %v674
      %v676 = vpop.xlane.xlu0 %675
      %v677 = vrcp.pop 32.0
      %v678 = vmul.f32 32.0, %v677
      %v679 = vsub.f32 1.0, %v678
      %v680 = vmul.f32 %v677, %v679
      %v681 = vadd.f32 %v677, %v680
      %vm682 = vweird.f32 %v677
      %v683 = vsel %vm682, %v677, %v681
      %v684 = vmul.f32 %v673, %v683
      %v685 = vmul.f32 %v676, %v683
      %v686 = vsub.f32 %v666, %v684
      %v687 = vsub.f32 %v667, %v685
      %v688 = vmul.f32 %v686, %v686
      %v689 = vmul.f32 %v687, %v687
      %v690 = vsel %vm670, %v688, 0.0
      %691 = vadd.xlane.f32.xlu0 %v690
      %v692 = vpop.xlane.xlu0 %691
      %v693 = vsel %vm670, %v689, 0.0
      %694 = vadd.xlane.f32.xlu0 %v693
      %v695 = vpop.xlane.xlu0 %694
      %v696 = vmul.f32 %v692, %v683
      %v697 = vmul.f32 %v695, %v683
      %v698 = vadd.f32 %v696, 1e-05
      %v699 = vadd.f32 %v697, 1e-05
      %v700 = vrsqrt.pop %v698
      %v701 = vmul.f32 %v700, %v698
      %v702 = vmul.f32 %v701, %v700
      %v703 = vmul.f32 0.5, %v702
      %v704 = vsub.f32 1.5, %v703
      %v705 = vmul.f32 %v700, %v704
      %vm706 = vweird.f32 %v698
      %vm707 = vweird.f32 %v700
      %vm708 = vmor %vm706, %vm707
      %v709 = vsel %vm708, %v700, %v705
      %v710 = vrsqrt.pop %v699
      %v711 = vmul.f32 %v710, %v699
      %v712 = vmul.f32 %v711, %v710
      %v713 = vmul.f32 0.5, %v712
      %v714 = vsub.f32 1.5, %v713
      %v715 = vmul.f32 %v710, %v714
      %vm716 = vweird.f32 %v699
      %vm717 = vweird.f32 %v710
      %vm718 = vmor %vm716, %vm717
      %v719 = vsel %vm718, %v710, %v715
      %v720 = vmul.f32 %v686, %v709
      %v721 = vmul.f32 %v687, %v719
      %v723 = vperm.slane %v668, 0
      %v725 = vmul.f32 %v720, %v723
      %v726 = vmul.f32 %v721, %v723
      %v728 = vperm.slane %v669, 0
      %v730 = vadd.f32 %v725, %v728
      %v731 = vadd.f32 %v726, %v728
      %v732 = vld [vmem:[%s614] sm:$0xff]
      %v733 = vld [vmem:[%s614 + $0x8] sm:$0xff]
      %v734 = vld [vmem:[%s614 + $0x10] sm:$0xff]
      %v735 = vld [vmem:[%s619] sm:$0xff]
      %v736 = vld [vmem:[%s619 + $0x8] sm:$0xff]
      %v737 = vld [vmem:[%s619 + $0x10] sm:$0xff]
      %v738 = vld [vmem:[%s624] sm:$0xff]
      %v739 = vld [vmem:[%s624 + $0x8] sm:$0xff]
      %vm740 = vcmask 130048
      %v742 = vsel %vm740, %v732, 0
      %v745 = vsel %vm740, %v733, 0
      %v748 = vsel %vm740, %v734, 0
      %750 = vmatpush.msra.mxu0 0.0
      %751 = vmatpush.msra.mxu0 0.0
      %752 = vmatpush.msra.mxu0 0.0
      %753 = vmatpush.msra.mxu0 0.0
      %754 = vmatpush.msra.mxu0 0.0
      %755 = vmatpush.msra.mxu0 0.0
      %756 = vmatpush.msra.mxu0 0.0
      %757 = vmatpush.msra.mxu0 0.0
      %758 = vmatpush.msra.mxu0 0.0
      %759 = vmatpush.msra.mxu0 0.0
      %760 = vmatpush.msra.mxu0 0.0
      %761 = vmatpush.msra.mxu0 0.0
      %762 = vmatpush.msra.mxu0 0.0
      %763 = vmatpush.msra.mxu0 0.0
      %764 = vmatpush.msra.mxu0 %v731
      %765 = vmatpush.msra.mxu0 %v730
      %766 = vmatmul.f32.gmra.mxu0 %v742
      %v767 = vpop.f32.mrf.mxu0
      %v768 = vadd.f32 %v735, %v767
      %769 = vmatmul.f32.gmra.mxu0 %v745
      %v770 = vpop.f32.mrf.mxu0
      %v771 = vadd.f32 %v736, %v770
      %772 = vmatmul.f32.gmra.mxu0 %v748
      %v773 = vpop.f32.mrf.mxu0
      %v774 = vadd.f32 %v737, %v773
      %775 = vdwg.mxu0
      %v776 = vmul.f32 %v768, 0.5
      %v777 = vmul.f32 %v771, 0.5
      %v778 = vmul.f32 %v774, 0.5
      %v779 = vmul.f32 %v768, 0.044715
      %v780 = vmul.f32 %v771, 0.044715
      %v781 = vmul.f32 %v774, 0.044715
      %v782 = vmul.f32 %v779, %v768
      %v783 = vmul.f32 %v780, %v771
      %v784 = vmul.f32 %v781, %v774
      %v785 = vmul.f32 %v782, %v768
      %v786 = vmul.f32 %v783, %v771
      %v787 = vmul.f32 %v784, %v774
      %v788 = vadd.f32 %v768, %v785
      %v789 = vadd.f32 %v771, %v786
      %v790 = vadd.f32 %v774, %v787
      %v791 = vmul.f32 %v788, 0.7978846
      %v792 = vmul.f32 %v789, 0.7978846
      %v793 = vmul.f32 %v790, 0.7978846
      %v794 = vtanh.pop %v791
      %v795 = vtanh.pop %v792
      %v796 = vtanh.pop %v793
      %v797 = vadd.f32 %v794, 1.0
      %v798 = vadd.f32 %v795, 1.0
      %v799 = vadd.f32 %v796, 1.0
      %v800 = vmul.f32 %v776, %v797
      %v801 = vmul.f32 %v777, %v798
      %v802 = vmul.f32 %v778, %v799
      %vm803 = vcmask 195584
      %v805 = vsel %vm803, %v738, 0
      %v808 = vsel %vm803, %v739, 0
      %810 = vmatpush.msra.mxu0 0.0
      %811 = vmatpush.msra.mxu0 0.0
      %812 = vmatpush.msra.mxu0 0.0
      %813 = vmatpush.msra.mxu0 0.0
      %814 = vmatpush.msra.mxu0 0.0
      %815 = vmatpush.msra.mxu0 0.0
      %816 = vmatpush.msra.mxu0 0.0
      %817 = vmatpush.msra.mxu0 0.0
      %818 = vmatpush.msra.mxu0 0.0
      %819 = vmatpush.msra.mxu0 0.0
      %820 = vmatpush.msra.mxu0 0.0
      %821 = vmatpush.msra.mxu0 0.0
      %822 = vmatpush.msra.mxu0 0.0
      %823 = vmatpush.msra.mxu0 %v802
      %824 = vmatpush.msra.mxu0 %v801
      %825 = vmatpush.msra.mxu0 %v800
      %826 = vmatmul.f32.gmra.mxu0 %v805
      %v827 = vpop.f32.mrf.mxu0
      %v828 = vadd.f32 0.0, %v827
      %829 = vmatmul.f32.gmra.mxu0 %v808
      %v830 = vpop.f32.mrf.mxu0
      %v831 = vadd.f32 0.0, %v830
      %832 = vdwg.mxu0
      %v833 = vadd.f32 %v666, %v828
      %v834 = vadd.f32 %v667, %v831
      %v835 = vld [vmem:[%s629] sm:$0xff]
      %v836 = vld [vmem:[%s629 + $0x8] sm:$0xff]
      %v837 = vadd.f32 %v833, %v835
      %v838 = vadd.f32 %v834, %v836
      %v839 = vld [vmem:[%s632] sm:$0x1]
      %v840 = vld [vmem:[%s635] sm:$0x1]
      %v841 = vsel %vm670, %v837, 0.0
      %842 = vadd.xlane.f32.xlu0 %v841
      %v843 = vpop.xlane.xlu0 %842
      %v844 = vsel %vm670, %v838, 0.0
      %845 = vadd.xlane.f32.xlu0 %v844
      %v846 = vpop.xlane.xlu0 %845
      %v847 = vmul.f32 %v843, %v683
      %v848 = vmul.f32 %v846, %v683
      %v849 = vsub.f32 %v837, %v847
      %v850 = vsub.f32 %v838, %v848
      %v851 = vmul.f32 %v849, %v849
      %v852 = vmul.f32 %v850, %v850
      %v853 = vsel %vm670, %v851, 0.0
      %854 = vadd.xlane.f32.xlu0 %v853
      %v855 = vpop.xlane.xlu0 %854
      %v856 = vsel %vm670, %v852, 0.0
      %857 = vadd.xlane.f32.xlu0 %v856
      %v858 = vpop.xlane.xlu0 %857
      %v859 = vmul.f32 %v855, %v683
      %v860 = vmul.f32 %v858, %v683
      %v861 = vadd.f32 %v859, 1e-05
      %v862 = vadd.f32 %v860, 1e-05
      %v863 = vrsqrt.pop %v861
      %v864 = vmul.f32 %v863, %v861
      %v865 = vmul.f32 %v864, %v863
      %v866 = vmul.f32 0.5, %v865
      %v867 = vsub.f32 1.5, %v866
      %v868 = vmul.f32 %v863, %v867
      %vm869 = vweird.f32 %v861
      %vm870 = vweird.f32 %v863
      %vm871 = vmor %vm869, %vm870
      %v872 = vsel %vm871, %v863, %v868
      %v873 = vrsqrt.pop %v862
      %v874 = vmul.f32 %v873, %v862
      %v875 = vmul.f32 %v874, %v873
      %v876 = vmul.f32 0.5, %v875
      %v877 = vsub.f32 1.5, %v876
      %v878 = vmul.f32 %v873, %v877
      %vm879 = vweird.f32 %v862
      %vm880 = vweird.f32 %v873
      %vm881 = vmor %vm879, %vm880
      %v882 = vsel %vm881, %v873, %v878
      %v883 = vmul.f32 %v849, %v872
      %v884 = vmul.f32 %v850, %v882
      %v886 = vperm.slane %v839, 0
      %v888 = vmul.f32 %v883, %v886
      %v889 = vmul.f32 %v884, %v886
      %v891 = vperm.slane %v840, 0
      %v893 = vadd.f32 %v888, %v891
      %v894 = vadd.f32 %v889, %v891
      %v895 = vld [vmem:[%s640] sm:$0xff]
      %v896 = vld [vmem:[%s640 + $0x8] sm:$0xff]
      %v897 = vld [vmem:[%s640 + $0x10] sm:$0xff]
      %v898 = vld [vmem:[%s640 + $0x18] sm:$0xff]
      %v899 = vld [vmem:[%s643] sm:$0x1]
      %v901 = vperm.slane %v899, 0
      %v904 = vsel %vm670, %v893, 0
      %v907 = vsel %vm670, %v894, 0
      %909 = vmatpush.msra.mxu0 0.0
      %910 = vmatpush.msra.mxu0 0.0
      %911 = vmatpush.msra.mxu0 0.0
      %912 = vmatpush.msra.mxu0 0.0
      %913 = vmatpush.msra.mxu0 0.0
      %914 = vmatpush.msra.mxu0 0.0
      %915 = vmatpush.msra.mxu0 0.0
      %916 = vmatpush.msra.mxu0 0.0
      %917 = vmatpush.msra.mxu0 0.0
      %918 = vmatpush.msra.mxu0 0.0
      %919 = vmatpush.msra.mxu0 0.0
      %920 = vmatpush.msra.mxu0 0.0
      %921 = vmatpush.msra.mxu0 %v898
      %922 = vmatpush.msra.mxu0 %v897
      %923 = vmatpush.msra.mxu0 %v896
      %924 = vmatpush.msra.mxu0 %v895
      %925 = vmatmul.f32.gmra.mxu0 %v904
      %v926 = vpop.f32.mrf.mxu0
      %v927 = vadd.f32 %v901, %v926
      %928 = vmatmul.f32.gmra.mxu0 %v907
      %v929 = vpop.f32.mrf.mxu0
      %v930 = vadd.f32 %v901, %v929
      %931 = vdwg.mxu0
      %v932 = vmul.f32 %v927, 0.5
      %v933 = vmul.f32 %v930, 0.5
      %v934 = vmul.f32 %v927, 0.044715
      %v935 = vmul.f32 %v930, 0.044715
      %v936 = vmul.f32 %v934, %v927
      %v937 = vmul.f32 %v935, %v930
      %v938 = vmul.f32 %v936, %v927
      %v939 = vmul.f32 %v937, %v930
      %v940 = vadd.f32 %v927, %v938
      %v941 = vadd.f32 %v930, %v939
      %v942 = vmul.f32 %v940, 0.7978846
      %v943 = vmul.f32 %v941, 0.7978846
      %v944 = vtanh.pop %v942
      %v945 = vtanh.pop %v943
      %v946 = vadd.f32 %v944, 1.0
      %v947 = vadd.f32 %v945, 1.0
      %v948 = vmul.f32 %v932, %v946
      %v949 = vmul.f32 %v933, %v947
      %v950 = vld [vmem:[%s648] sm:$0xff]
      %v951 = vld [vmem:[%s648 + $0x8] sm:$0xff]
      %v952 = vld [vmem:[%s648 + $0x10] sm:$0xff]
      %v953 = vld [vmem:[%s648 + $0x18] sm:$0xff]
      %v954 = vld [vmem:[%s648 + $0x20] sm:$0xff]
      %v955 = vld [vmem:[%s648 + $0x28] sm:$0xff]
      %v956 = vld [vmem:[%s648 + $0x30] sm:$0xff]
      %v957 = vld [vmem:[%s648 + $0x38] sm:$0xff]
      %v958 = vld [vmem:[%s651] sm:$0x1]
      %v960 = vperm.slane %v958, 0
      %vm962 = vcmask 523264
      %v964 = vsel %vm962, %v948, 0
      %v967 = vsel %vm962, %v949, 0
      %969 = vmatpush.msra.mxu0 0.0
      %970 = vmatpush.msra.mxu0 0.0
      %971 = vmatpush.msra.mxu0 0.0
      %972 = vmatpush.msra.mxu0 0.0
      %973 = vmatpush.msra.mxu0 0.0
      %974 = vmatpush.msra.mxu0 0.0
      %975 = vmatpush.msra.mxu0 0.0
      %976 = vmatpush.msra.mxu0 0.0
      %977 = vmatpush.msra.mxu0 %v957
      %978 = vmatpush.msra.mxu0 %v956
      %979 = vmatpush.msra.mxu0 %v955
      %980 = vmatpush.msra.mxu0 %v954
      %981 = vmatpush.msra.mxu0 %v953
      %982 = vmatpush.msra.mxu0 %v952
      %983 = vmatpush.msra.mxu0 %v951
      %984 = vmatpush.msra.mxu0 %v950
      %985 = vmatmul.f32.gmra.mxu0 %v964
      %v986 = vpop.f32.mrf.mxu0
      %v987 = vadd.f32 %v960, %v986
      %988 = vmatmul.f32.gmra.mxu0 %v967
      %v989 = vpop.f32.mrf.mxu0
      %v990 = vadd.f32 %v960, %v989
      %991 = vdwg.mxu0
      %v992 = vadd.f32 %v837, %v987
      %v993 = vadd.f32 %v838, %v990
      %994 = vst.msk [vmem:[#allocation2] sm:$0xff] %vm670, %v992
      %995 = vst.msk [vmem:[#allocation2 + $0x8] sm:$0xff] %vm670, %v993
      %p996 = scmp.eq.s32.totalorder %s29, 1
      // Predicated region
      $region77: #{_lambda_.4} parent=71 // pred_check
        %p997 = pneg %p996
      $region78: #{_lambda_.4} parent=71 // pred_check_branch
        %999 = sbr.rel (%p997) target = $region80
      $region79: #{_lambda_.4} parent=71 // pred_region
        %1000 = vst.msk [vmem:[%s656] sm:$0xff] %vm670, %v992
        %1001 = vst.msk [vmem:[%s656 + $0x8] sm:$0xff] %vm670, %v993
      $region80: #{_lambda_.4} parent=71 // pred_fallthru
        _
      %p1002 = scmp.lt.s32.totalorder %s28, 1
      %s1003 = scalar_select %p1002, %s28, 1
      %s1004 = smul.addr %s1003, 2
      %s1005 = smul.addr %s1004, 8
      %s1006 = scalar_lea.vmem %s13, %s1005
      // Predicated region
      $region81: #{_lambda_.4} parent=71 // pred_check
        %p1007 = pneg %p392
      $region82: #{_lambda_.4} parent=71 // pred_check_branch
        %1009 = sbr.rel (%p1007) target = $region84
      $region83: #{_lambda_.4} parent=71 // pred_region
        _
      $region84: #{_lambda_.4} parent=71 // pred_fallthru
        _
    $region72: #{_lambda_.4} parent=5 // pred_fallthru
      _
    %p1010 = scmp.le.s32.totalorder 2, %s19
    // Predicated region
    $region85: #{_lambda_.4} parent=5 // pred_check
      %p1011 = pneg %p1010
    $region86: #{_lambda_.4} parent=5 // pred_check_branch
      %1013 = sbr.rel (%p1011) target = $region88
    $region87: #{_lambda_.4} parent=5 // pred_region
      %s1014 = ssub.s32 %s19, 2
      // Predicated region
      $region89: #{_lambda_.4} parent=87 // pred_check
        %p1015 = pneg %p398
      $region90: #{_lambda_.4} parent=87 // pred_check_branch
        %1017 = sbr.rel (%p1015) target = $region92
      $region91: #{_lambda_.4} parent=87 // pred_region
        %p1018 = scmp.lt.s32.totalorder %s30, 1
        %s1019 = scalar_select %p1018, %s30, 1
        %s1020 = smul.addr %s1019, 2
        %s1021 = smul.addr %s1020, 8
        %s1022 = scalar_lea.vmem %s13, %s1021
      $region92: #{_lambda_.4} parent=87 // pred_fallthru
        _
    $region88: #{_lambda_.4} parent=5 // pred_fallthru
      _
  $region6: #{_lambda_.4} parent=0 // loop_footer
    %s23 = sadd.s32 1, %s19
  $region7: #{_lambda_.4} parent=0 // loop_footer_branch
    %18 = sbr.rel target = $region3
  $region8: #{_lambda_.4} parent=0 // loop_exit
    _

</llo_original>
